<compile_context>
chip_gen: v7x
topology: tpu7x:2x2x1
jax: 0.10.0
libtpu: 0.0.40
codegen_flags: <defaults>
</compile_context>

<pallas_src>
import math
import functools

import jax
import jax.numpy as jnp
import numpy as np
from jax import lax
from jax.experimental import pallas as pl
from jax.experimental.pallas import tpu as pltpu


def _layer_norm_f32(x, g, b, eps=1e-5):
    m = jnp.mean(x, axis=-1, keepdims=True)
    v = jnp.mean(jnp.square(x - m), axis=-1, keepdims=True)
    return (x - m) * lax.rsqrt(v + eps) * g + b


def _conv1d_taps(x, w_ref, bias, *, kernel_size):
    """'same' 1-D conv over the time axis as K accumulated tap matmuls.

    x:      (Bt, T, Cin) bf16 activation
    w_ref:  (K, Cin, Cout) bf16 weight ref
    bias:   (1, Cout) f32
    returns (Bt*T, Cout) f32
    """
    Bt, T, Cin = x.shape
    Cout = w_ref.shape[-1]
    K = kernel_size
    pad = K // 2
    if pad > 0:
        zeros = jnp.zeros((Bt, pad, Cin), x.dtype)
        xpad = jnp.concatenate([zeros, x, zeros], axis=1)          # (Bt, T+2p, Cin)
    else:
        xpad = x
    acc = jnp.zeros((Bt * T, Cout), jnp.float32)
    for k in range(K):                                             # K small & static
        tap = xpad[:, k:k + T, :].reshape(Bt * T, Cin)             # bf16 shifted tap
        acc = acc + jnp.dot(tap, w_ref[k], preferred_element_type=jnp.float32)
    return acc + bias


# -----------------------------------------------------------------------------
# Fused kernel: attention + LN1 + conv-FFN + LN2 for one layer, grid over batch
# -----------------------------------------------------------------------------
def _fft_layer_kernel(x_ref, wqkv_ref, wh_ref, g1_ref, b1_ref,
                      w1_ref, c1_ref, w2_ref, c2_ref, g2_ref, b2_ref,
                      o_ref, *, num_heads, d_dim, kernel_size):
    Bt, T, D = x_ref.shape
    HD = num_heads * d_dim
    inner = w1_ref.shape[-1]

    x = x_ref[...].astype(jnp.float32)                             # (Bt, T, D)
    xb = x.reshape(Bt * T, D).astype(jnp.bfloat16)

    # ---- fused multi-head self-attention -------------------------------------
    # One full-width QKV projection over all Bt*T rows.  The 1/sqrt(d) score
    # scale is already folded into the Q columns of wqkv (done at init).
    qkv = jnp.dot(xb, wqkv_ref[...],
                  preferred_element_type=jnp.float32).reshape(Bt, T, 3 * HD)

    attn_rows = []
    for b in range(Bt):                        # small static batch tile
        row = jnp.zeros((T, D), jnp.float32)
        for h in range(num_heads):             # H=2 for FastSpeech2; scores of
            lo = h * d_dim                     # each head die within its iter
            q = qkv[b, :, lo:lo + d_dim].astype(jnp.bfloat16)
            k = qkv[b, :, HD + lo:HD + lo + d_dim].astype(jnp.bfloat16)
            v = qkv[b, :, 2 * HD + lo:2 * HD + lo + d_dim].astype(jnp.bfloat16)
            # contract last dims of q and k: no materialized k.T
            s = lax.dot_general(q, k, (((1,), (1,)), ((), ())),
                                preferred_element_type=jnp.float32)        # (T, T)
            s = s - jnp.max(s, axis=-1, keepdims=True)
            p = jnp.exp(s)
            # EUP reciprocal instead of a VPU divide over the (T, T) tensor
            p = p * pl.reciprocal(jnp.sum(p, axis=-1, keepdims=True), approx=True)
            o_h = jnp.dot(p.astype(jnp.bfloat16), v,
                          preferred_element_type=jnp.float32)              # (T, d)
            # accumulate the per-head output projection (no lane-axis concat)
            row = row + jnp.dot(o_h.astype(jnp.bfloat16),
                                wh_ref[lo:lo + d_dim, :],
                                preferred_element_type=jnp.float32)        # (T, D)
        attn_rows.append(row)
    attn = jnp.stack(attn_rows, axis=0)                            # (Bt, T, D)

    # TODO(synk): nn.Dropout (train mode) is stochastic; eval-mode identity here.
    y = _layer_norm_f32(attn + x, g1_ref[...], b1_ref[...])        # (Bt, T, D) f32

    # ---- conv1d -> ReLU -> conv1d (accumulated taps, no im2col / no scratch) --
    h1 = _conv1d_taps(y.astype(jnp.bfloat16), w1_ref, c1_ref[...],
                      kernel_size=kernel_size)
    h1 = jnp.maximum(h1, 0.0)                                      # (Bt*T, inner)
    h2 = _conv1d_taps(h1.astype(jnp.bfloat16).reshape(Bt, T, inner),
                      w2_ref, c2_ref[...], kernel_size=kernel_size)
    h2 = h2.reshape(Bt, T, D)

    # TODO(synk): second nn.Dropout also eval-mode identity.
    out = _layer_norm_f32(h2 + y, g2_ref[...], b2_ref[...])
    o_ref[...] = out.astype(o_ref.dtype)


def _pick_batch_tile(batch):
    # Keep >= 2 grid steps so v7x's two TensorCores both get work, but take the
    # largest such divisor (<= 8) to amortize the ~0.35us per-step cost and to
    # fill MXU rows / sublanes when T is short.
    for bt in (8, 4, 2, 1):
        if batch % bt == 0 and batch // bt >= 2:
            return bt
    return 1


def _vmem_limit_bytes():
    # ~3/4 of physical VMEM: ~96 MiB on v5e/v6e (128 MiB), ~48 MiB on v7x (64 MiB).
    try:
        cap = int(pltpu.get_tpu_info().vmem_capacity_bytes)
    except Exception:
        cap = 64 * 1024 * 1024
    return max(32 * 1024 * 1024, (cap * 3) // 4)


def _fft_layer(x, lp, *, num_heads, d_dim, kernel_size, batch_tile=None):
    B, T, D = x.shape
    bt = batch_tile if batch_tile is not None else _pick_batch_tile(B)
    assert B % bt == 0
    kernel = functools.partial(_fft_layer_kernel, num_heads=num_heads,
                               d_dim=d_dim, kernel_size=kernel_size)

    def full_spec(a):
        nd = a.ndim
        return pl.BlockSpec(a.shape, lambda b: (0,) * nd)   # grid-invariant weights

    return pl.pallas_call(
        kernel,
        out_shape=jax.ShapeDtypeStruct((B, T, D), x.dtype),
        grid_spec=pltpu.PrefetchScalarGridSpec(
            num_scalar_prefetch=0,
            grid=(B // bt,),
            in_specs=[
                pl.BlockSpec((bt, T, D), lambda b: (b, 0, 0)),
                full_spec(lp["wqkv"]), full_spec(lp["wh"]),
                full_spec(lp["ln1_g"]), full_spec(lp["ln1_b"]),
                full_spec(lp["w1"]), full_spec(lp["c1"]),
                full_spec(lp["w2"]), full_spec(lp["c2"]),
                full_spec(lp["ln2_g"]), full_spec(lp["ln2_b"]),
            ],
            out_specs=pl.BlockSpec((bt, T, D), lambda b: (b, 0, 0)),
        ),
        compiler_params=pltpu.CompilerParams(
            dimension_semantics=("parallel",),        # batch tiles independent
            vmem_limit_bytes=_vmem_limit_bytes(),     # generation-aware budget
        ),
    )(x, lp["wqkv"], lp["wh"], lp["ln1_g"], lp["ln1_b"],
      lp["w1"], lp["c1"], lp["w2"], lp["c2"], lp["ln2_g"], lp["ln2_b"])


# -----------------------------------------------------------------------------
# FFTBlock forward (Pallas)
# -----------------------------------------------------------------------------
def fft_block_forward(x, layers, *, num_heads, d_dim, kernel_size):
    for lp in layers:
        x = _fft_layer(x, lp, num_heads=num_heads, d_dim=d_dim,
                       kernel_size=kernel_size)
    return x


# -----------------------------------------------------------------------------
# Deterministic parameter init (+ pure-JAX f32 reference for validation)
# -----------------------------------------------------------------------------
def init_params(key, num_layers, d_dim, num_heads, inner_dim, kernel_size):
    torch_like = []   # PyTorch-oriented f32 weights (for the reference)
    kernel_like = []  # rearranged / bf16-cast for the Pallas kernels
    HD = d_dim * num_heads
    scale = 1.0 / math.sqrt(d_dim)    # folded into the Q columns of wqkv
    for i in range(num_layers):
        ks = jax.random.split(jax.random.fold_in(key, i), 12)
        s = 0.1
        WQ = jax.random.normal(ks[0], (d_dim, HD), jnp.float32) * s   # = weight.T
        WK = jax.random.normal(ks[1], (d_dim, HD), jnp.float32) * s
        WV = jax.random.normal(ks[2], (d_dim, HD), jnp.float32) * s
        WH = jax.random.normal(ks[3], (HD, d_dim), jnp.float32) * s
        W1 = jax.random.normal(ks[4], (inner_dim, d_dim, kernel_size), jnp.float32) * s  # (O,I,K)
        b1 = jax.random.normal(ks[5], (inner_dim,), jnp.float32) * s
        W2 = jax.random.normal(ks[6], (d_dim, inner_dim, kernel_size), jnp.float32) * s
        b2 = jax.random.normal(ks[7], (d_dim,), jnp.float32) * s
        ln1_g = 1.0 + 0.05 * jax.random.normal(ks[8], (d_dim,), jnp.float32)
        ln1_b = 0.05 * jax.random.normal(ks[9], (d_dim,), jnp.float32)
        ln2_g = 1.0 + 0.05 * jax.random.normal(ks[10], (d_dim,), jnp.float32)
        ln2_b = 0.05 * jax.random.normal(ks[11], (d_dim,), jnp.float32)

        torch_like.append(dict(WQ=WQ, WK=WK, WV=WV, WH=WH, W1=W1, b1=b1, W2=W2, b2=b2,
                               ln1_g=ln1_g, ln1_b=ln1_b, ln2_g=ln2_g, ln2_b=ln2_b))
        kernel_like.append(dict(
            # fused QKV projection (D, 3*H*D); 1/sqrt(d) pre-folded into Q part
            wqkv=jnp.concatenate([WQ * scale, WK, WV], axis=1).astype(jnp.bfloat16),
            wh=WH.astype(jnp.bfloat16),                               # (H*D, D)
            # conv tap weights: (O, I, K) -> (K, I, O), bf16 MXU operands
            w1=W1.transpose(2, 1, 0).astype(jnp.bfloat16),            # (K, D, inner)
            c1=b1.reshape(1, inner_dim),
            w2=W2.transpose(2, 1, 0).astype(jnp.bfloat16),            # (K, inner, D)
            c2=b2.reshape(1, d_dim),
            ln1_g=ln1_g.reshape(1, d_dim), ln1_b=ln1_b.reshape(1, d_dim),
            ln2_g=ln2_g.reshape(1, d_dim), ln2_b=ln2_b.reshape(1, d_dim),
        ))
    return torch_like, kernel_like


def _layer_norm_ref(x, g, b, eps=1e-5):
    m = jnp.mean(x, axis=-1, keepdims=True)
    v = jnp.mean((x - m) ** 2, axis=-1, keepdims=True)
    return (x - m) * lax.rsqrt(v + eps) * g + b


def ref_fft_block(x, torch_params, *, num_heads, d_dim, kernel_size):
    pad = kernel_size // 2
    for lp in torch_params:
        B, T, D = x.shape
        H = num_heads
        q = (x @ lp["WQ"]).reshape(B, T, H, D).transpose(0, 2, 1, 3)
        k = (x @ lp["WK"]).reshape(B, T, H, D).transpose(0, 2, 1, 3)
        v = (x @ lp["WV"]).reshape(B, T, H, D).transpose(0, 2, 1, 3)
        a = jnp.einsum("bhtd,bhsd->bhts", q, k) / math.sqrt(d_dim)
        a = jax.nn.softmax(a, axis=-1)
        hh = jnp.einsum("bhts,bhsd->bhtd", a, v)
        hh = hh.transpose(0, 2, 1, 3).reshape(B, T, H * D)
        x1 = hh @ lp["WH"]
        x = _layer_norm_ref(x1 + x, lp["ln1_g"], lp["ln1_b"])

        xc = x.transpose(0, 2, 1)                                          # (B, D, T)
        y = lax.conv_general_dilated(xc, lp["W1"], (1,), [(pad, pad)],
                                     dimension_numbers=("NCH", "OIH", "NCH"))
        y = jnp.maximum(y + lp["b1"][None, :, None], 0.0)
        y = lax.conv_general_dilated(y, lp["W2"], (1,), [(pad, pad)],
                                     dimension_numbers=("NCH", "OIH", "NCH"))
        y = y + lp["b2"][None, :, None]
        x1 = y.transpose(0, 2, 1)
        x = _layer_norm_ref(x1 + x, lp["ln2_g"], lp["ln2_b"])
    return x


if __name__ == "__main__":
    num_layers, d_dim, num_heads, inner_dim, kernel_size = 2, 32, 2, 64, 3
    B, T = 4, 16   # batch of 4 -> batch tile 2, grid of 2 parallel steps

    key = jax.random.PRNGKey(0)
    kx, kp = jax.random.split(key)
    x = jax.random.normal(kx, (B, T, d_dim), jnp.float32)

    torch_params, kernel_params = init_params(kp, num_layers, d_dim, num_heads,
                                              inner_dim, kernel_size)

    out = fft_block_forward(x, kernel_params, num_heads=num_heads,
                            d_dim=d_dim, kernel_size=kernel_size)
    out = jax.block_until_ready(out)

    ref = ref_fft_block(x, torch_params, num_heads=num_heads,
                        d_dim=d_dim, kernel_size=kernel_size)
    # Kernel uses bf16 MXU operands (f32 accumulation) and an approximate EUP
    # reciprocal; the f32 reference is matched to bf16-level tolerance.
    np.testing.assert_allclose(np.asarray(out), np.asarray(ref), rtol=5e-2, atol=5e-2)

    print("KERNEL_OK")
</pallas_src>

<mosaic_0001>
module attributes {stable_mosaic.version = 11 : i64} {
  func.func @_fft_layer_kernel(%arg0: i32, %arg1: memref<2x16x32xf32, #tpu.memory_space<vmem>>, %arg2: memref<32x192xbf16, #tpu.memory_space<vmem>>, %arg3: memref<64x32xbf16, #tpu.memory_space<vmem>>, %arg4: memref<1x32xf32, #tpu.memory_space<vmem>>, %arg5: memref<1x32xf32, #tpu.memory_space<vmem>>, %arg6: memref<3x32x64xbf16, #tpu.memory_space<vmem>>, %arg7: memref<1x64xf32, #tpu.memory_space<vmem>>, %arg8: memref<3x64x32xbf16, #tpu.memory_space<vmem>>, %arg9: memref<1x32xf32, #tpu.memory_space<vmem>>, %arg10: memref<1x32xf32, #tpu.memory_space<vmem>>, %arg11: memref<1x32xf32, #tpu.memory_space<vmem>>, %arg12: memref<2x16x32xf32, #tpu.memory_space<vmem>>) attributes {dimension_semantics = [#tpu.dimension_semantics<parallel>], iteration_bounds = array<i64: 2>, scalar_prefetch = 0 : i64, scratch_operands = 0 : i64, tpu.core_type = #tpu.core_type<tc>, window_params = [{transform_indices = @transform_0, window_bounds = array<i64: 2, 16, 32>}, {pipeline_mode = #tpu.pipeline_mode<synchronous>, transform_indices = @transform_1, window_bounds = array<i64: 32, 192>}, {pipeline_mode = #tpu.pipeline_mode<synchronous>, transform_indices = @transform_2, window_bounds = array<i64: 64, 32>}, {pipeline_mode = #tpu.pipeline_mode<synchronous>, transform_indices = @transform_3, window_bounds = array<i64: 1, 32>}, {pipeline_mode = #tpu.pipeline_mode<synchronous>, transform_indices = @transform_4, window_bounds = array<i64: 1, 32>}, {pipeline_mode = #tpu.pipeline_mode<synchronous>, transform_indices = @transform_5, window_bounds = array<i64: 3, 32, 64>}, {pipeline_mode = #tpu.pipeline_mode<synchronous>, transform_indices = @transform_6, window_bounds = array<i64: 1, 64>}, {pipeline_mode = #tpu.pipeline_mode<synchronous>, transform_indices = @transform_7, window_bounds = array<i64: 3, 64, 32>}, {pipeline_mode = #tpu.pipeline_mode<synchronous>, transform_indices = @transform_8, window_bounds = array<i64: 1, 32>}, {pipeline_mode = #tpu.pipeline_mode<synchronous>, transform_indices = @transform_9, window_bounds = array<i64: 1, 32>}, {pipeline_mode = #tpu.pipeline_mode<synchronous>, transform_indices = @transform_10, window_bounds = array<i64: 1, 32>}, {transform_indices = @transform_11, window_bounds = array<i64: 2, 16, 32>}]} {
    %c0 = arith.constant 0 : index
    %c0_0 = arith.constant 0 : index
    %c0_1 = arith.constant 0 : index
    %0 = vector.load %arg1[%c0, %c0_0, %c0_1] : memref<2x16x32xf32, #tpu.memory_space<vmem>>, vector<2x16x32xf32>
    %1 = vector.shape_cast %0 : vector<2x16x32xf32> to vector<32x32xf32>
    %2 = arith.truncf %1 : vector<32x32xf32> to vector<32x32xbf16>
    %c0_2 = arith.constant 0 : index
    %c0_3 = arith.constant 0 : index
    %3 = vector.load %arg2[%c0_2, %c0_3] : memref<32x192xbf16, #tpu.memory_space<vmem>>, vector<32x192xbf16>
    %cst = arith.constant dense<0.000000e+00> : vector<32x192xf32>
    %4 = tpu.matmul %2, %3, %cst {dimension_numbers = #tpu.dot_dimension_numbers<[1], [0], [0], [1], [0, 0, 1, 1], [], []>} : vector<32x32xbf16>, vector<32x192xbf16>, vector<32x192xf32> -> vector<32x192xf32>
    %5 = vector.shape_cast %4 : vector<32x192xf32> to vector<2x16x192xf32>
    %cst_4 = arith.constant 0.000000e+00 : f32
    %6 = vector.broadcast %cst_4 : f32 to vector<16x32xf32>
    %7 = vector.extract_strided_slice %5 {offsets = [0, 0, 0], sizes = [1, 16, 32], strides = [1, 1, 1]} : vector<2x16x192xf32> to vector<1x16x32xf32>
    %8 = vector.shape_cast %7 : vector<1x16x32xf32> to vector<16x32xf32>
    %9 = arith.truncf %8 : vector<16x32xf32> to vector<16x32xbf16>
    %10 = vector.extract_strided_slice %5 {offsets = [0, 0, 64], sizes = [1, 16, 32], strides = [1, 1, 1]} : vector<2x16x192xf32> to vector<1x16x32xf32>
    %11 = vector.shape_cast %10 : vector<1x16x32xf32> to vector<16x32xf32>
    %12 = arith.truncf %11 : vector<16x32xf32> to vector<16x32xbf16>
    %13 = vector.extract_strided_slice %5 {offsets = [0, 0, 128], sizes = [1, 16, 32], strides = [1, 1, 1]} : vector<2x16x192xf32> to vector<1x16x32xf32>
    %14 = vector.shape_cast %13 : vector<1x16x32xf32> to vector<16x32xf32>
    %15 = arith.truncf %14 : vector<16x32xf32> to vector<16x32xbf16>
    %cst_5 = arith.constant dense<0.000000e+00> : vector<16x16xf32>
    %16 = tpu.matmul %9, %12, %cst_5 {dimension_numbers = #tpu.dot_dimension_numbers<[1], [1], [0], [0], [0, 0, 1, 0], [], []>} : vector<16x32xbf16>, vector<16x32xbf16>, vector<16x16xf32> -> vector<16x16xf32>
    %cst_6 = arith.constant dense<0xFF800000> : vector<16xf32>
    %17 = vector.multi_reduction <maximumf>, %16, %cst_6 [1] : vector<16x16xf32> to vector<16xf32>
    %18 = vector.shape_cast %17 : vector<16xf32> to vector<16x1xf32>
    %19 = vector.broadcast %18 : vector<16x1xf32> to vector<16x16xf32>
    %20 = arith.subf %16, %19 : vector<16x16xf32>
    %21 = math.exp %20 : vector<16x16xf32>
    %cst_7 = arith.constant dense<0.000000e+00> : vector<16xf32>
    %22 = vector.multi_reduction <add>, %21, %cst_7 [1] : vector<16x16xf32> to vector<16xf32>
    %23 = vector.shape_cast %22 : vector<16xf32> to vector<16x1xf32>
    %24 = tpu.reciprocal %23 {approx = true} : vector<16x1xf32> -> vector<16x1xf32>
    %25 = vector.broadcast %24 : vector<16x1xf32> to vector<16x16xf32>
    %26 = arith.mulf %21, %25 : vector<16x16xf32>
    %27 = arith.truncf %26 : vector<16x16xf32> to vector<16x16xbf16>
    %cst_8 = arith.constant dense<0.000000e+00> : vector<16x32xf32>
    %28 = tpu.matmul %27, %15, %cst_8 {dimension_numbers = #tpu.dot_dimension_numbers<[1], [0], [0], [1], [0, 0, 1, 1], [], []>} : vector<16x16xbf16>, vector<16x32xbf16>, vector<16x32xf32> -> vector<16x32xf32>
    %29 = arith.truncf %28 : vector<16x32xf32> to vector<16x32xbf16>
    %c0_9 = arith.constant 0 : index
    %c0_10 = arith.constant 0 : index
    %30 = vector.load %arg3[%c0_9, %c0_10] : memref<64x32xbf16, #tpu.memory_space<vmem>>, vector<32x32xbf16>
    %cst_11 = arith.constant dense<0.000000e+00> : vector<16x32xf32>
    %31 = tpu.matmul %29, %30, %cst_11 {dimension_numbers = #tpu.dot_dimension_numbers<[1], [0], [0], [1], [0, 0, 1, 1], [], []>} : vector<16x32xbf16>, vector<32x32xbf16>, vector<16x32xf32> -> vector<16x32xf32>
    %32 = arith.addf %6, %31 : vector<16x32xf32>
    %33 = vector.extract_strided_slice %5 {offsets = [0, 0, 32], sizes = [1, 16, 32], strides = [1, 1, 1]} : vector<2x16x192xf32> to vector<1x16x32xf32>
    %34 = vector.shape_cast %33 : vector<1x16x32xf32> to vector<16x32xf32>
    %35 = arith.truncf %34 : vector<16x32xf32> to vector<16x32xbf16>
    %36 = vector.extract_strided_slice %5 {offsets = [0, 0, 96], sizes = [1, 16, 32], strides = [1, 1, 1]} : vector<2x16x192xf32> to vector<1x16x32xf32>
    %37 = vector.shape_cast %36 : vector<1x16x32xf32> to vector<16x32xf32>
    %38 = arith.truncf %37 : vector<16x32xf32> to vector<16x32xbf16>
    %39 = vector.extract_strided_slice %5 {offsets = [0, 0, 160], sizes = [1, 16, 32], strides = [1, 1, 1]} : vector<2x16x192xf32> to vector<1x16x32xf32>
    %40 = vector.shape_cast %39 : vector<1x16x32xf32> to vector<16x32xf32>
    %41 = arith.truncf %40 : vector<16x32xf32> to vector<16x32xbf16>
    %cst_12 = arith.constant dense<0.000000e+00> : vector<16x16xf32>
    %42 = tpu.matmul %35, %38, %cst_12 {dimension_numbers = #tpu.dot_dimension_numbers<[1], [1], [0], [0], [0, 0, 1, 0], [], []>} : vector<16x32xbf16>, vector<16x32xbf16>, vector<16x16xf32> -> vector<16x16xf32>
    %cst_13 = arith.constant dense<0xFF800000> : vector<16xf32>
    %43 = vector.multi_reduction <maximumf>, %42, %cst_13 [1] : vector<16x16xf32> to vector<16xf32>
    %44 = vector.shape_cast %43 : vector<16xf32> to vector<16x1xf32>
    %45 = vector.broadcast %44 : vector<16x1xf32> to vector<16x16xf32>
    %46 = arith.subf %42, %45 : vector<16x16xf32>
    %47 = math.exp %46 : vector<16x16xf32>
    %cst_14 = arith.constant dense<0.000000e+00> : vector<16xf32>
    %48 = vector.multi_reduction <add>, %47, %cst_14 [1] : vector<16x16xf32> to vector<16xf32>
    %49 = vector.shape_cast %48 : vector<16xf32> to vector<16x1xf32>
    %50 = tpu.reciprocal %49 {approx = true} : vector<16x1xf32> -> vector<16x1xf32>
    %51 = vector.broadcast %50 : vector<16x1xf32> to vector<16x16xf32>
    %52 = arith.mulf %47, %51 : vector<16x16xf32>
    %53 = arith.truncf %52 : vector<16x16xf32> to vector<16x16xbf16>
    %cst_15 = arith.constant dense<0.000000e+00> : vector<16x32xf32>
    %54 = tpu.matmul %53, %41, %cst_15 {dimension_numbers = #tpu.dot_dimension_numbers<[1], [0], [0], [1], [0, 0, 1, 1], [], []>} : vector<16x16xbf16>, vector<16x32xbf16>, vector<16x32xf32> -> vector<16x32xf32>
    %55 = arith.truncf %54 : vector<16x32xf32> to vector<16x32xbf16>
    %c32 = arith.constant 32 : index
    %c0_16 = arith.constant 0 : index
    %56 = vector.load %arg3[%c32, %c0_16] : memref<64x32xbf16, #tpu.memory_space<vmem>>, vector<32x32xbf16>
    %cst_17 = arith.constant dense<0.000000e+00> : vector<16x32xf32>
    %57 = tpu.matmul %55, %56, %cst_17 {dimension_numbers = #tpu.dot_dimension_numbers<[1], [0], [0], [1], [0, 0, 1, 1], [], []>} : vector<16x32xbf16>, vector<32x32xbf16>, vector<16x32xf32> -> vector<16x32xf32>
    %58 = arith.addf %32, %57 : vector<16x32xf32>
    %cst_18 = arith.constant 0.000000e+00 : f32
    %59 = vector.broadcast %cst_18 : f32 to vector<16x32xf32>
    %60 = vector.extract_strided_slice %5 {offsets = [1, 0, 0], sizes = [1, 16, 32], strides = [1, 1, 1]} : vector<2x16x192xf32> to vector<1x16x32xf32>
    %61 = vector.shape_cast %60 : vector<1x16x32xf32> to vector<16x32xf32>
    %62 = arith.truncf %61 : vector<16x32xf32> to vector<16x32xbf16>
    %63 = vector.extract_strided_slice %5 {offsets = [1, 0, 64], sizes = [1, 16, 32], strides = [1, 1, 1]} : vector<2x16x192xf32> to vector<1x16x32xf32>
    %64 = vector.shape_cast %63 : vector<1x16x32xf32> to vector<16x32xf32>
    %65 = arith.truncf %64 : vector<16x32xf32> to vector<16x32xbf16>
    %66 = vector.extract_strided_slice %5 {offsets = [1, 0, 128], sizes = [1, 16, 32], strides = [1, 1, 1]} : vector<2x16x192xf32> to vector<1x16x32xf32>
    %67 = vector.shape_cast %66 : vector<1x16x32xf32> to vector<16x32xf32>
    %68 = arith.truncf %67 : vector<16x32xf32> to vector<16x32xbf16>
    %cst_19 = arith.constant dense<0.000000e+00> : vector<16x16xf32>
    %69 = tpu.matmul %62, %65, %cst_19 {dimension_numbers = #tpu.dot_dimension_numbers<[1], [1], [0], [0], [0, 0, 1, 0], [], []>} : vector<16x32xbf16>, vector<16x32xbf16>, vector<16x16xf32> -> vector<16x16xf32>
    %cst_20 = arith.constant dense<0xFF800000> : vector<16xf32>
    %70 = vector.multi_reduction <maximumf>, %69, %cst_20 [1] : vector<16x16xf32> to vector<16xf32>
    %71 = vector.shape_cast %70 : vector<16xf32> to vector<16x1xf32>
    %72 = vector.broadcast %71 : vector<16x1xf32> to vector<16x16xf32>
    %73 = arith.subf %69, %72 : vector<16x16xf32>
    %74 = math.exp %73 : vector<16x16xf32>
    %cst_21 = arith.constant dense<0.000000e+00> : vector<16xf32>
    %75 = vector.multi_reduction <add>, %74, %cst_21 [1] : vector<16x16xf32> to vector<16xf32>
    %76 = vector.shape_cast %75 : vector<16xf32> to vector<16x1xf32>
    %77 = tpu.reciprocal %76 {approx = true} : vector<16x1xf32> -> vector<16x1xf32>
    %78 = vector.broadcast %77 : vector<16x1xf32> to vector<16x16xf32>
    %79 = arith.mulf %74, %78 : vector<16x16xf32>
    %80 = arith.truncf %79 : vector<16x16xf32> to vector<16x16xbf16>
    %cst_22 = arith.constant dense<0.000000e+00> : vector<16x32xf32>
    %81 = tpu.matmul %80, %68, %cst_22 {dimension_numbers = #tpu.dot_dimension_numbers<[1], [0], [0], [1], [0, 0, 1, 1], [], []>} : vector<16x16xbf16>, vector<16x32xbf16>, vector<16x32xf32> -> vector<16x32xf32>
    %82 = arith.truncf %81 : vector<16x32xf32> to vector<16x32xbf16>
    %c0_23 = arith.constant 0 : index
    %c0_24 = arith.constant 0 : index
    %83 = vector.load %arg3[%c0_23, %c0_24] : memref<64x32xbf16, #tpu.memory_space<vmem>>, vector<32x32xbf16>
    %cst_25 = arith.constant dense<0.000000e+00> : vector<16x32xf32>
    %84 = tpu.matmul %82, %83, %cst_25 {dimension_numbers = #tpu.dot_dimension_numbers<[1], [0], [0], [1], [0, 0, 1, 1], [], []>} : vector<16x32xbf16>, vector<32x32xbf16>, vector<16x32xf32> -> vector<16x32xf32>
    %85 = arith.addf %59, %84 : vector<16x32xf32>
    %86 = vector.extract_strided_slice %5 {offsets = [1, 0, 32], sizes = [1, 16, 32], strides = [1, 1, 1]} : vector<2x16x192xf32> to vector<1x16x32xf32>
    %87 = vector.shape_cast %86 : vector<1x16x32xf32> to vector<16x32xf32>
    %88 = arith.truncf %87 : vector<16x32xf32> to vector<16x32xbf16>
    %89 = vector.extract_strided_slice %5 {offsets = [1, 0, 96], sizes = [1, 16, 32], strides = [1, 1, 1]} : vector<2x16x192xf32> to vector<1x16x32xf32>
    %90 = vector.shape_cast %89 : vector<1x16x32xf32> to vector<16x32xf32>
    %91 = arith.truncf %90 : vector<16x32xf32> to vector<16x32xbf16>
    %92 = vector.extract_strided_slice %5 {offsets = [1, 0, 160], sizes = [1, 16, 32], strides = [1, 1, 1]} : vector<2x16x192xf32> to vector<1x16x32xf32>
    %93 = vector.shape_cast %92 : vector<1x16x32xf32> to vector<16x32xf32>
    %94 = arith.truncf %93 : vector<16x32xf32> to vector<16x32xbf16>
    %cst_26 = arith.constant dense<0.000000e+00> : vector<16x16xf32>
    %95 = tpu.matmul %88, %91, %cst_26 {dimension_numbers = #tpu.dot_dimension_numbers<[1], [1], [0], [0], [0, 0, 1, 0], [], []>} : vector<16x32xbf16>, vector<16x32xbf16>, vector<16x16xf32> -> vector<16x16xf32>
    %cst_27 = arith.constant dense<0xFF800000> : vector<16xf32>
    %96 = vector.multi_reduction <maximumf>, %95, %cst_27 [1] : vector<16x16xf32> to vector<16xf32>
    %97 = vector.shape_cast %96 : vector<16xf32> to vector<16x1xf32>
    %98 = vector.broadcast %97 : vector<16x1xf32> to vector<16x16xf32>
    %99 = arith.subf %95, %98 : vector<16x16xf32>
    %100 = math.exp %99 : vector<16x16xf32>
    %cst_28 = arith.constant dense<0.000000e+00> : vector<16xf32>
    %101 = vector.multi_reduction <add>, %100, %cst_28 [1] : vector<16x16xf32> to vector<16xf32>
    %102 = vector.shape_cast %101 : vector<16xf32> to vector<16x1xf32>
    %103 = tpu.reciprocal %102 {approx = true} : vector<16x1xf32> -> vector<16x1xf32>
    %104 = vector.broadcast %103 : vector<16x1xf32> to vector<16x16xf32>
    %105 = arith.mulf %100, %104 : vector<16x16xf32>
    %106 = arith.truncf %105 : vector<16x16xf32> to vector<16x16xbf16>
    %cst_29 = arith.constant dense<0.000000e+00> : vector<16x32xf32>
    %107 = tpu.matmul %106, %94, %cst_29 {dimension_numbers = #tpu.dot_dimension_numbers<[1], [0], [0], [1], [0, 0, 1, 1], [], []>} : vector<16x16xbf16>, vector<16x32xbf16>, vector<16x32xf32> -> vector<16x32xf32>
    %108 = arith.truncf %107 : vector<16x32xf32> to vector<16x32xbf16>
    %c32_30 = arith.constant 32 : index
    %c0_31 = arith.constant 0 : index
    %109 = vector.load %arg3[%c32_30, %c0_31] : memref<64x32xbf16, #tpu.memory_space<vmem>>, vector<32x32xbf16>
    %cst_32 = arith.constant dense<0.000000e+00> : vector<16x32xf32>
    %110 = tpu.matmul %108, %109, %cst_32 {dimension_numbers = #tpu.dot_dimension_numbers<[1], [0], [0], [1], [0, 0, 1, 1], [], []>} : vector<16x32xbf16>, vector<32x32xbf16>, vector<16x32xf32> -> vector<16x32xf32>
    %111 = arith.addf %85, %110 : vector<16x32xf32>
    %112 = vector.shape_cast %58 : vector<16x32xf32> to vector<1x16x32xf32>
    %113 = vector.shape_cast %111 : vector<16x32xf32> to vector<1x16x32xf32>
    %114 = tpu.concatenate %112, %113 in 0 : vector<1x16x32xf32>, vector<1x16x32xf32> -> vector<2x16x32xf32>
    %115 = arith.addf %114, %0 : vector<2x16x32xf32>
    %c0_33 = arith.constant 0 : index
    %c0_34 = arith.constant 0 : index
    %116 = vector.load %arg4[%c0_33, %c0_34] : memref<1x32xf32, #tpu.memory_space<vmem>>, vector<1x32xf32>
    %c0_35 = arith.constant 0 : index
    %c0_36 = arith.constant 0 : index
    %117 = vector.load %arg5[%c0_35, %c0_36] : memref<1x32xf32, #tpu.memory_space<vmem>>, vector<1x32xf32>
    %cst_37 = arith.constant dense<0.000000e+00> : vector<2x16xf32>
    %118 = vector.multi_reduction <add>, %115, %cst_37 [2] : vector<2x16x32xf32> to vector<2x16xf32>
    %119 = vector.shape_cast %118 : vector<2x16xf32> to vector<2x16x1xf32>
    %cst_38 = arith.constant 3.200000e+01 : f32
    %120 = vector.broadcast %cst_38 : f32 to vector<2x16x1xf32>
    %121 = arith.divf %119, %120 : vector<2x16x1xf32>
    %122 = vector.broadcast %121 : vector<2x16x1xf32> to vector<2x16x32xf32>
    %123 = arith.subf %115, %122 : vector<2x16x32xf32>
    %124 = arith.mulf %123, %123 : vector<2x16x32xf32>
    %cst_39 = arith.constant dense<0.000000e+00> : vector<2x16xf32>
    %125 = vector.multi_reduction <add>, %124, %cst_39 [2] : vector<2x16x32xf32> to vector<2x16xf32>
    %126 = vector.shape_cast %125 : vector<2x16xf32> to vector<2x16x1xf32>
    %cst_40 = arith.constant 3.200000e+01 : f32
    %127 = vector.broadcast %cst_40 : f32 to vector<2x16x1xf32>
    %128 = arith.divf %126, %127 : vector<2x16x1xf32>
    %129 = vector.broadcast %121 : vector<2x16x1xf32> to vector<2x16x32xf32>
    %130 = arith.subf %115, %129 : vector<2x16x32xf32>
    %cst_41 = arith.constant 9.99999974E-6 : f32
    %131 = vector.broadcast %cst_41 : f32 to vector<2x16x1xf32>
    %132 = arith.addf %128, %131 : vector<2x16x1xf32>
    %133 = math.rsqrt %132 : vector<2x16x1xf32>
    %134 = vector.broadcast %133 : vector<2x16x1xf32> to vector<2x16x32xf32>
    %135 = arith.mulf %130, %134 : vector<2x16x32xf32>
    %136 = vector.shape_cast %116 : vector<1x32xf32> to vector<1x1x32xf32>
    %137 = vector.broadcast %136 : vector<1x1x32xf32> to vector<2x16x32xf32>
    %138 = arith.mulf %135, %137 : vector<2x16x32xf32>
    %139 = vector.shape_cast %117 : vector<1x32xf32> to vector<1x1x32xf32>
    %140 = vector.broadcast %139 : vector<1x1x32xf32> to vector<2x16x32xf32>
    %141 = arith.addf %138, %140 : vector<2x16x32xf32>
    %142 = arith.truncf %141 : vector<2x16x32xf32> to vector<2x16x32xbf16>
    %c0_42 = arith.constant 0 : index
    %c0_43 = arith.constant 0 : index
    %143 = vector.load %arg7[%c0_42, %c0_43] : memref<1x64xf32, #tpu.memory_space<vmem>>, vector<1x64xf32>
    %cst_44 = arith.constant 0.000000e+00 : bf16
    %144 = vector.broadcast %cst_44 : bf16 to vector<2x1x32xbf16>
    %145 = tpu.concatenate %144, %142, %144 in 1 : vector<2x1x32xbf16>, vector<2x16x32xbf16>, vector<2x1x32xbf16> -> vector<2x18x32xbf16>
    %cst_45 = arith.constant 0.000000e+00 : f32
    %146 = vector.broadcast %cst_45 : f32 to vector<32x64xf32>
    %147 = vector.extract_strided_slice %145 {offsets = [0, 0, 0], sizes = [2, 16, 32], strides = [1, 1, 1]} : vector<2x18x32xbf16> to vector<2x16x32xbf16>
    %148 = vector.shape_cast %147 : vector<2x16x32xbf16> to vector<32x32xbf16>
    %c0_46 = arith.constant 0 : index
    %c0_47 = arith.constant 0 : index
    %c0_48 = arith.constant 0 : index
    %149 = vector.load %arg6[%c0_46, %c0_47, %c0_48] : memref<3x32x64xbf16, #tpu.memory_space<vmem>>, vector<1x32x64xbf16>
    %150 = vector.shape_cast %149 : vector<1x32x64xbf16> to vector<32x64xbf16>
    %cst_49 = arith.constant dense<0.000000e+00> : vector<32x64xf32>
    %151 = tpu.matmul %148, %150, %cst_49 {dimension_numbers = #tpu.dot_dimension_numbers<[1], [0], [0], [1], [0, 0, 1, 1], [], []>} : vector<32x32xbf16>, vector<32x64xbf16>, vector<32x64xf32> -> vector<32x64xf32>
    %152 = arith.addf %146, %151 : vector<32x64xf32>
    %153 = vector.extract_strided_slice %145 {offsets = [0, 1, 0], sizes = [2, 16, 32], strides = [1, 1, 1]} : vector<2x18x32xbf16> to vector<2x16x32xbf16>
    %154 = vector.shape_cast %153 : vector<2x16x32xbf16> to vector<32x32xbf16>
    %c1 = arith.constant 1 : index
    %c0_50 = arith.constant 0 : index
    %c0_51 = arith.constant 0 : index
    %155 = vector.load %arg6[%c1, %c0_50, %c0_51] : memref<3x32x64xbf16, #tpu.memory_space<vmem>>, vector<1x32x64xbf16>
    %156 = vector.shape_cast %155 : vector<1x32x64xbf16> to vector<32x64xbf16>
    %cst_52 = arith.constant dense<0.000000e+00> : vector<32x64xf32>
    %157 = tpu.matmul %154, %156, %cst_52 {dimension_numbers = #tpu.dot_dimension_numbers<[1], [0], [0], [1], [0, 0, 1, 1], [], []>} : vector<32x32xbf16>, vector<32x64xbf16>, vector<32x64xf32> -> vector<32x64xf32>
    %158 = arith.addf %152, %157 : vector<32x64xf32>
    %159 = vector.extract_strided_slice %145 {offsets = [0, 2, 0], sizes = [2, 16, 32], strides = [1, 1, 1]} : vector<2x18x32xbf16> to vector<2x16x32xbf16>
    %160 = vector.shape_cast %159 : vector<2x16x32xbf16> to vector<32x32xbf16>
    %c2 = arith.constant 2 : index
    %c0_53 = arith.constant 0 : index
    %c0_54 = arith.constant 0 : index
    %161 = vector.load %arg6[%c2, %c0_53, %c0_54] : memref<3x32x64xbf16, #tpu.memory_space<vmem>>, vector<1x32x64xbf16>
    %162 = vector.shape_cast %161 : vector<1x32x64xbf16> to vector<32x64xbf16>
    %cst_55 = arith.constant dense<0.000000e+00> : vector<32x64xf32>
    %163 = tpu.matmul %160, %162, %cst_55 {dimension_numbers = #tpu.dot_dimension_numbers<[1], [0], [0], [1], [0, 0, 1, 1], [], []>} : vector<32x32xbf16>, vector<32x64xbf16>, vector<32x64xf32> -> vector<32x64xf32>
    %164 = arith.addf %158, %163 : vector<32x64xf32>
    %165 = vector.broadcast %143 : vector<1x64xf32> to vector<32x64xf32>
    %166 = arith.addf %164, %165 : vector<32x64xf32>
    %cst_56 = arith.constant 0.000000e+00 : f32
    %167 = vector.broadcast %cst_56 : f32 to vector<32x64xf32>
    %168 = arith.maximumf %166, %167 : vector<32x64xf32>
    %169 = arith.truncf %168 : vector<32x64xf32> to vector<32x64xbf16>
    %170 = vector.shape_cast %169 : vector<32x64xbf16> to vector<2x16x64xbf16>
    %c0_57 = arith.constant 0 : index
    %c0_58 = arith.constant 0 : index
    %171 = vector.load %arg9[%c0_57, %c0_58] : memref<1x32xf32, #tpu.memory_space<vmem>>, vector<1x32xf32>
    %cst_59 = arith.constant 0.000000e+00 : bf16
    %172 = vector.broadcast %cst_59 : bf16 to vector<2x1x64xbf16>
    %173 = tpu.concatenate %172, %170, %172 in 1 : vector<2x1x64xbf16>, vector<2x16x64xbf16>, vector<2x1x64xbf16> -> vector<2x18x64xbf16>
    %cst_60 = arith.constant 0.000000e+00 : f32
    %174 = vector.broadcast %cst_60 : f32 to vector<32x32xf32>
    %175 = vector.extract_strided_slice %173 {offsets = [0, 0, 0], sizes = [2, 16, 64], strides = [1, 1, 1]} : vector<2x18x64xbf16> to vector<2x16x64xbf16>
    %176 = vector.shape_cast %175 : vector<2x16x64xbf16> to vector<32x64xbf16>
    %c0_61 = arith.constant 0 : index
    %c0_62 = arith.constant 0 : index
    %c0_63 = arith.constant 0 : index
    %177 = vector.load %arg8[%c0_61, %c0_62, %c0_63] : memref<3x64x32xbf16, #tpu.memory_space<vmem>>, vector<1x64x32xbf16>
    %178 = vector.shape_cast %177 : vector<1x64x32xbf16> to vector<64x32xbf16>
    %cst_64 = arith.constant dense<0.000000e+00> : vector<32x32xf32>
    %179 = tpu.matmul %176, %178, %cst_64 {dimension_numbers = #tpu.dot_dimension_numbers<[1], [0], [0], [1], [0, 0, 1, 1], [], []>} : vector<32x64xbf16>, vector<64x32xbf16>, vector<32x32xf32> -> vector<32x32xf32>
    %180 = arith.addf %174, %179 : vector<32x32xf32>
    %181 = vector.extract_strided_slice %173 {offsets = [0, 1, 0], sizes = [2, 16, 64], strides = [1, 1, 1]} : vector<2x18x64xbf16> to vector<2x16x64xbf16>
    %182 = vector.shape_cast %181 : vector<2x16x64xbf16> to vector<32x64xbf16>
    %c1_65 = arith.constant 1 : index
    %c0_66 = arith.constant 0 : index
    %c0_67 = arith.constant 0 : index
    %183 = vector.load %arg8[%c1_65, %c0_66, %c0_67] : memref<3x64x32xbf16, #tpu.memory_space<vmem>>, vector<1x64x32xbf16>
    %184 = vector.shape_cast %183 : vector<1x64x32xbf16> to vector<64x32xbf16>
    %cst_68 = arith.constant dense<0.000000e+00> : vector<32x32xf32>
    %185 = tpu.matmul %182, %184, %cst_68 {dimension_numbers = #tpu.dot_dimension_numbers<[1], [0], [0], [1], [0, 0, 1, 1], [], []>} : vector<32x64xbf16>, vector<64x32xbf16>, vector<32x32xf32> -> vector<32x32xf32>
    %186 = arith.addf %180, %185 : vector<32x32xf32>
    %187 = vector.extract_strided_slice %173 {offsets = [0, 2, 0], sizes = [2, 16, 64], strides = [1, 1, 1]} : vector<2x18x64xbf16> to vector<2x16x64xbf16>
    %188 = vector.shape_cast %187 : vector<2x16x64xbf16> to vector<32x64xbf16>
    %c2_69 = arith.constant 2 : index
    %c0_70 = arith.constant 0 : index
    %c0_71 = arith.constant 0 : index
    %189 = vector.load %arg8[%c2_69, %c0_70, %c0_71] : memref<3x64x32xbf16, #tpu.memory_space<vmem>>, vector<1x64x32xbf16>
    %190 = vector.shape_cast %189 : vector<1x64x32xbf16> to vector<64x32xbf16>
    %cst_72 = arith.constant dense<0.000000e+00> : vector<32x32xf32>
    %191 = tpu.matmul %188, %190, %cst_72 {dimension_numbers = #tpu.dot_dimension_numbers<[1], [0], [0], [1], [0, 0, 1, 1], [], []>} : vector<32x64xbf16>, vector<64x32xbf16>, vector<32x32xf32> -> vector<32x32xf32>
    %192 = arith.addf %186, %191 : vector<32x32xf32>
    %193 = vector.broadcast %171 : vector<1x32xf32> to vector<32x32xf32>
    %194 = arith.addf %192, %193 : vector<32x32xf32>
    %195 = vector.shape_cast %194 : vector<32x32xf32> to vector<2x16x32xf32>
    %196 = arith.addf %195, %141 : vector<2x16x32xf32>
    %c0_73 = arith.constant 0 : index
    %c0_74 = arith.constant 0 : index
    %197 = vector.load %arg10[%c0_73, %c0_74] : memref<1x32xf32, #tpu.memory_space<vmem>>, vector<1x32xf32>
    %c0_75 = arith.constant 0 : index
    %c0_76 = arith.constant 0 : index
    %198 = vector.load %arg11[%c0_75, %c0_76] : memref<1x32xf32, #tpu.memory_space<vmem>>, vector<1x32xf32>
    %cst_77 = arith.constant dense<0.000000e+00> : vector<2x16xf32>
    %199 = vector.multi_reduction <add>, %196, %cst_77 [2] : vector<2x16x32xf32> to vector<2x16xf32>
    %200 = vector.shape_cast %199 : vector<2x16xf32> to vector<2x16x1xf32>
    %cst_78 = arith.constant 3.200000e+01 : f32
    %201 = vector.broadcast %cst_78 : f32 to vector<2x16x1xf32>
    %202 = arith.divf %200, %201 : vector<2x16x1xf32>
    %203 = vector.broadcast %202 : vector<2x16x1xf32> to vector<2x16x32xf32>
    %204 = arith.subf %196, %203 : vector<2x16x32xf32>
    %205 = arith.mulf %204, %204 : vector<2x16x32xf32>
    %cst_79 = arith.constant dense<0.000000e+00> : vector<2x16xf32>
    %206 = vector.multi_reduction <add>, %205, %cst_79 [2] : vector<2x16x32xf32> to vector<2x16xf32>
    %207 = vector.shape_cast %206 : vector<2x16xf32> to vector<2x16x1xf32>
    %cst_80 = arith.constant 3.200000e+01 : f32
    %208 = vector.broadcast %cst_80 : f32 to vector<2x16x1xf32>
    %209 = arith.divf %207, %208 : vector<2x16x1xf32>
    %210 = vector.broadcast %202 : vector<2x16x1xf32> to vector<2x16x32xf32>
    %211 = arith.subf %196, %210 : vector<2x16x32xf32>
    %cst_81 = arith.constant 9.99999974E-6 : f32
    %212 = vector.broadcast %cst_81 : f32 to vector<2x16x1xf32>
    %213 = arith.addf %209, %212 : vector<2x16x1xf32>
    %214 = math.rsqrt %213 : vector<2x16x1xf32>
    %215 = vector.broadcast %214 : vector<2x16x1xf32> to vector<2x16x32xf32>
    %216 = arith.mulf %211, %215 : vector<2x16x32xf32>
    %217 = vector.shape_cast %197 : vector<1x32xf32> to vector<1x1x32xf32>
    %218 = vector.broadcast %217 : vector<1x1x32xf32> to vector<2x16x32xf32>
    %219 = arith.mulf %216, %218 : vector<2x16x32xf32>
    %220 = vector.shape_cast %198 : vector<1x32xf32> to vector<1x1x32xf32>
    %221 = vector.broadcast %220 : vector<1x1x32xf32> to vector<2x16x32xf32>
    %222 = arith.addf %219, %221 : vector<2x16x32xf32>
    %c0_82 = arith.constant 0 : index
    %c0_83 = arith.constant 0 : index
    %c0_84 = arith.constant 0 : index
    %223 = vector.load %arg12[%c0_82, %c0_83, %c0_84] : memref<2x16x32xf32, #tpu.memory_space<vmem>>, vector<2x16x32xf32>
    tpu.vector_store %arg12[%c0_82, %c0_83, %c0_84], %222 {strides = array<i32>} : memref<2x16x32xf32, #tpu.memory_space<vmem>>, vector<2x16x32xf32>,
    return
  }
  func.func @transform_0(%arg0: i32) -> (i32, i32, i32) {
    %c0_i32 = arith.constant 0 : i32
    %c0_i32_0 = arith.constant 0 : i32
    %c0_i32_1 = arith.constant 0 : i32
    return %arg0, %c0_i32, %c0_i32_0 : i32, i32, i32
  }
  func.func @transform_1(%arg0: i32) -> (i32, i32) {
    %c0_i32 = arith.constant 0 : i32
    %c0_i32_0 = arith.constant 0 : i32
    %c0_i32_1 = arith.constant 0 : i32
    return %c0_i32, %c0_i32_0 : i32, i32
  }
  func.func @transform_2(%arg0: i32) -> (i32, i32) {
    %c0_i32 = arith.constant 0 : i32
    %c0_i32_0 = arith.constant 0 : i32
    %c0_i32_1 = arith.constant 0 : i32
    return %c0_i32, %c0_i32_0 : i32, i32
  }
  func.func @transform_3(%arg0: i32) -> (i32, i32) {
    %c0_i32 = arith.constant 0 : i32
    %c0_i32_0 = arith.constant 0 : i32
    %c0_i32_1 = arith.constant 0 : i32
    return %c0_i32, %c0_i32_0 : i32, i32
  }
  func.func @transform_4(%arg0: i32) -> (i32, i32) {
    %c0_i32 = arith.constant 0 : i32
    %c0_i32_0 = arith.constant 0 : i32
    %c0_i32_1 = arith.constant 0 : i32
    return %c0_i32, %c0_i32_0 : i32, i32
  }
  func.func @transform_5(%arg0: i32) -> (i32, i32, i32) {
    %c0_i32 = arith.constant 0 : i32
    %c0_i32_0 = arith.constant 0 : i32
    %c0_i32_1 = arith.constant 0 : i32
    %c0_i32_2 = arith.constant 0 : i32
    return %c0_i32, %c0_i32_0, %c0_i32_1 : i32, i32, i32
  }
  func.func @transform_6(%arg0: i32) -> (i32, i32) {
    %c0_i32 = arith.constant 0 : i32
    %c0_i32_0 = arith.constant 0 : i32
    %c0_i32_1 = arith.constant 0 : i32
    return %c0_i32, %c0_i32_0 : i32, i32
  }
  func.func @transform_7(%arg0: i32) -> (i32, i32, i32) {
    %c0_i32 = arith.constant 0 : i32
    %c0_i32_0 = arith.constant 0 : i32
    %c0_i32_1 = arith.constant 0 : i32
    %c0_i32_2 = arith.constant 0 : i32
    return %c0_i32, %c0_i32_0, %c0_i32_1 : i32, i32, i32
  }
  func.func @transform_8(%arg0: i32) -> (i32, i32) {
    %c0_i32 = arith.constant 0 : i32
    %c0_i32_0 = arith.constant 0 : i32
    %c0_i32_1 = arith.constant 0 : i32
    return %c0_i32, %c0_i32_0 : i32, i32
  }
  func.func @transform_9(%arg0: i32) -> (i32, i32) {
    %c0_i32 = arith.constant 0 : i32
    %c0_i32_0 = arith.constant 0 : i32
    %c0_i32_1 = arith.constant 0 : i32
    return %c0_i32, %c0_i32_0 : i32, i32
  }
  func.func @transform_10(%arg0: i32) -> (i32, i32) {
    %c0_i32 = arith.constant 0 : i32
    %c0_i32_0 = arith.constant 0 : i32
    %c0_i32_1 = arith.constant 0 : i32
    return %c0_i32, %c0_i32_0 : i32, i32
  }
  func.func @transform_11(%arg0: i32) -> (i32, i32, i32) {
    %c0_i32 = arith.constant 0 : i32
    %c0_i32_0 = arith.constant 0 : i32
    %c0_i32_1 = arith.constant 0 : i32
    return %arg0, %c0_i32, %c0_i32_0 : i32, i32, i32
  }
}

</mosaic_0001>

<llo_original>
// kernel: tpu_custom_call.1
$region0: #{tpu_custom_call.1}
  #allocation0 [shape = 'u32[]', space=smem, size = 0x4, offset = 0x4, fixed_abs, tag = 'smem constant byte address 0x4 - core index']
  #allocation1 [shape = 'u32[144,128]{1,0:T(1,128)}', space=vmem, size = 0x12000, scoped, tag = 'internal scratch']
  %s0 = inlined_call_operand.vmem [shape: f32[4,16,32], index: 0, kind: input, shape index: {}]
  %s1 = inlined_call_operand.vmem [shape: bf16[32,192], index: 1, kind: input, shape index: {}]
  %s2 = inlined_call_operand.vmem [shape: bf16[64,32], index: 2, kind: input, shape index: {}]
  %s3 = inlined_call_operand.vmem [shape: f32[1,32], index: 3, kind: input, shape index: {}]
  %s4 = inlined_call_operand.vmem [shape: f32[1,32], index: 4, kind: input, shape index: {}]
  %s5 = inlined_call_operand.vmem [shape: bf16[3,32,64], index: 5, kind: input, shape index: {}]
  %s6 = inlined_call_operand.vmem [shape: f32[1,64], index: 6, kind: input, shape index: {}]
  %s7 = inlined_call_operand.vmem [shape: bf16[3,64,32], index: 7, kind: input, shape index: {}]
  %s8 = inlined_call_operand.vmem [shape: f32[1,32], index: 8, kind: input, shape index: {}]
  %s9 = inlined_call_operand.vmem [shape: f32[1,32], index: 9, kind: input, shape index: {}]
  %s10 = inlined_call_operand.vmem [shape: f32[1,32], index: 10, kind: input, shape index: {}]
  %s11 = inlined_call_operand.hbm [shape: f32[4,16,32], index: 11, kind: output, shape index: {}]
  %s12 = sld [smem:[#allocation0]]
  $region77: #{tpu_custom_call.1} parent=0
    _
  %s14 = ssub.s32 1, %s12
  %s15 = scalar_select 0, %s14, %s12
  $region1: #{tpu_custom_call.1} parent=0
    #allocation2 [shape = 'u8[32768]{0}', space=vmem, size = 0x8000, scoped, tag = 'output window, operand 0']
    #allocation3 [shape = 's32[2]{0}', space=sflag, size = 0x8, scoped, tag = 'scoped memory for tpu_custom_call.1']
    %16 = vsyncpa [#allocation3], 0
    %s17 = scalar_lea.sflag [#allocation3], 1
    %18 = vsyncpa %s17, 0
    loop: start=0, step=1, limit=4
    $region2: #{tpu_custom_call.1} parent=1 // loop_pre_header
      _
    $region3: #{tpu_custom_call.1} parent=1 // loop_header
      %s20 = sphi 0, %s24
      %p21 = scmp.ge.s32.totalorder %s20, 4
      %s30 = sphi 0, %s32
      %s33 = sphi 0, %s30
      %s34 = sphi 0, %s33
      %s50 = sphi 0, %s34
      %s54 = sphi 0, %s54
      %s56 = sphi 0, %s54
      %s57 = sphi 0, %s56
      %s71 = sphi 0, %s57
      %s75 = sphi 0, %s75
      %s77 = sphi 0, %s75
      %s78 = sphi 0, %s77
      %s92 = sphi 0, %s78
      %s96 = sphi 0, %s96
      %s98 = sphi 0, %s96
      %s99 = sphi 0, %s98
      %s113 = sphi 0, %s99
      %s117 = sphi 0, %s117
      %s119 = sphi 0, %s117
      %s120 = sphi 0, %s119
      %s134 = sphi 0, %s120
      %s138 = sphi 0, %s138
      %s140 = sphi 0, %s138
      %s141 = sphi 0, %s140
      %s155 = sphi 0, %s141
      %s159 = sphi 0, %s159
      %s161 = sphi 0, %s159
      %s162 = sphi 0, %s161
      %s176 = sphi 0, %s162
      %s180 = sphi 0, %s180
      %s182 = sphi 0, %s180
      %s183 = sphi 0, %s182
      %s197 = sphi 0, %s183
      %s201 = sphi 0, %s201
      %s203 = sphi 0, %s201
      %s204 = sphi 0, %s203
      %s218 = sphi 0, %s204
      %s222 = sphi 0, %s222
      %s224 = sphi 0, %s222
      %s225 = sphi 0, %s224
      %s239 = sphi 0, %s225
      %s243 = sphi 0, %s243
      %s245 = sphi 0, %s243
      %s246 = sphi 0, %s245
      %s260 = sphi 0, %s246
      %s266 = sphi 0, %s268
      %s269 = sphi 0, %s266
      %s270 = sphi 0, %s269
      %s286 = sphi 0, %s270
    $region4: #{tpu_custom_call.1} parent=1 // loop_header_branch
      %23 = sbr.rel (%p21) target = $region8
    $region5: #{tpu_custom_call.1} parent=1 // loop_body
      %s25 = ssub.s32 %s20, 1
      %s26 = ssub.s32 %s20, 2
      %s27 = sadd.s32 %s20, 1
      %s28 = ssub.s32 %s20, %s27
      %p29 = scmp.eq.s32.totalorder %s28, 0
      %s31 = sadd.s32 %s30, 1
      %s32 = scalar_select %p29, %s30, %s31
      %p35 = pneg %p29
      %p36 = scmp.eq.s32.totalorder %s20, 1
      %p37 = por %p35, %p36
      %p38 = scmp.ne.s32.totalorder %s30, %s33
      %p39 = scmp.eq.s32.totalorder %s20, 0
      %p40 = por %p38, %p39
      %p41 = scmp.ne.s32.totalorder %s30, %s33
      %p42 = scmp.eq.s32.totalorder %s25, 1
      %p43 = por %p41, %p42
      %p44 = scmp.ne.s32.totalorder %s33, %s34
      %p45 = scmp.eq.s32.totalorder %s25, 0
      %p46 = por %p44, %p45
      %p47 = scmp.ne.s32.totalorder %s33, %s34
      %p48 = scmp.eq.s32.totalorder %s26, 1
      %p49 = por %p47, %p48
      %p51 = scmp.ne.s32.totalorder %s34, %s50
      %p52 = scmp.eq.s32.totalorder %s26, 0
      %p53 = por %p51, %p52
      %s55 = sadd.s32 %s54, 1
      %p58 = scmp.eq.s32.totalorder %s20, 1
      %p59 = scmp.ne.s32.totalorder %s54, %s56
      %p60 = scmp.eq.s32.totalorder %s20, 0
      %p61 = por %p59, %p60
      %p62 = scmp.ne.s32.totalorder %s54, %s56
      %p63 = scmp.eq.s32.totalorder %s25, 1
      %p64 = por %p62, %p63
      %p65 = scmp.ne.s32.totalorder %s56, %s57
      %p66 = scmp.eq.s32.totalorder %s25, 0
      %p67 = por %p65, %p66
      %p68 = scmp.ne.s32.totalorder %s56, %s57
      %p69 = scmp.eq.s32.totalorder %s26, 1
      %p70 = por %p68, %p69
      %p72 = scmp.ne.s32.totalorder %s57, %s71
      %p73 = scmp.eq.s32.totalorder %s26, 0
      %p74 = por %p72, %p73
      %s76 = sadd.s32 %s75, 1
      %p79 = scmp.eq.s32.totalorder %s20, 1
      %p80 = scmp.ne.s32.totalorder %s75, %s77
      %p81 = scmp.eq.s32.totalorder %s20, 0
      %p82 = por %p80, %p81
      %p83 = scmp.ne.s32.totalorder %s75, %s77
      %p84 = scmp.eq.s32.totalorder %s25, 1
      %p85 = por %p83, %p84
      %p86 = scmp.ne.s32.totalorder %s77, %s78
      %p87 = scmp.eq.s32.totalorder %s25, 0
      %p88 = por %p86, %p87
      %p89 = scmp.ne.s32.totalorder %s77, %s78
      %p90 = scmp.eq.s32.totalorder %s26, 1
      %p91 = por %p89, %p90
      %p93 = scmp.ne.s32.totalorder %s78, %s92
      %p94 = scmp.eq.s32.totalorder %s26, 0
      %p95 = por %p93, %p94
      %s97 = sadd.s32 %s96, 1
      %p100 = scmp.eq.s32.totalorder %s20, 1
      %p101 = scmp.ne.s32.totalorder %s96, %s98
      %p102 = scmp.eq.s32.totalorder %s20, 0
      %p103 = por %p101, %p102
      %p104 = scmp.ne.s32.totalorder %s96, %s98
      %p105 = scmp.eq.s32.totalorder %s25, 1
      %p106 = por %p104, %p105
      %p107 = scmp.ne.s32.totalorder %s98, %s99
      %p108 = scmp.eq.s32.totalorder %s25, 0
      %p109 = por %p107, %p108
      %p110 = scmp.ne.s32.totalorder %s98, %s99
      %p111 = scmp.eq.s32.totalorder %s26, 1
      %p112 = por %p110, %p111
      %p114 = scmp.ne.s32.totalorder %s99, %s113
      %p115 = scmp.eq.s32.totalorder %s26, 0
      %p116 = por %p114, %p115
      %s118 = sadd.s32 %s117, 1
      %p121 = scmp.eq.s32.totalorder %s20, 1
      %p122 = scmp.ne.s32.totalorder %s117, %s119
      %p123 = scmp.eq.s32.totalorder %s20, 0
      %p124 = por %p122, %p123
      %p125 = scmp.ne.s32.totalorder %s117, %s119
      %p126 = scmp.eq.s32.totalorder %s25, 1
      %p127 = por %p125, %p126
      %p128 = scmp.ne.s32.totalorder %s119, %s120
      %p129 = scmp.eq.s32.totalorder %s25, 0
      %p130 = por %p128, %p129
      %p131 = scmp.ne.s32.totalorder %s119, %s120
      %p132 = scmp.eq.s32.totalorder %s26, 1
      %p133 = por %p131, %p132
      %p135 = scmp.ne.s32.totalorder %s120, %s134
      %p136 = scmp.eq.s32.totalorder %s26, 0
      %p137 = por %p135, %p136
      %s139 = sadd.s32 %s138, 1
      %p142 = scmp.eq.s32.totalorder %s20, 1
      %p143 = scmp.ne.s32.totalorder %s138, %s140
      %p144 = scmp.eq.s32.totalorder %s20, 0
      %p145 = por %p143, %p144
      %p146 = scmp.ne.s32.totalorder %s138, %s140
      %p147 = scmp.eq.s32.totalorder %s25, 1
      %p148 = por %p146, %p147
      %p149 = scmp.ne.s32.totalorder %s140, %s141
      %p150 = scmp.eq.s32.totalorder %s25, 0
      %p151 = por %p149, %p150
      %p152 = scmp.ne.s32.totalorder %s140, %s141
      %p153 = scmp.eq.s32.totalorder %s26, 1
      %p154 = por %p152, %p153
      %p156 = scmp.ne.s32.totalorder %s141, %s155
      %p157 = scmp.eq.s32.totalorder %s26, 0
      %p158 = por %p156, %p157
      %s160 = sadd.s32 %s159, 1
      %p163 = scmp.eq.s32.totalorder %s20, 1
      %p164 = scmp.ne.s32.totalorder %s159, %s161
      %p165 = scmp.eq.s32.totalorder %s20, 0
      %p166 = por %p164, %p165
      %p167 = scmp.ne.s32.totalorder %s159, %s161
      %p168 = scmp.eq.s32.totalorder %s25, 1
      %p169 = por %p167, %p168
      %p170 = scmp.ne.s32.totalorder %s161, %s162
      %p171 = scmp.eq.s32.totalorder %s25, 0
      %p172 = por %p170, %p171
      %p173 = scmp.ne.s32.totalorder %s161, %s162
      %p174 = scmp.eq.s32.totalorder %s26, 1
      %p175 = por %p173, %p174
      %p177 = scmp.ne.s32.totalorder %s162, %s176
      %p178 = scmp.eq.s32.totalorder %s26, 0
      %p179 = por %p177, %p178
      %s181 = sadd.s32 %s180, 1
      %p184 = scmp.eq.s32.totalorder %s20, 1
      %p185 = scmp.ne.s32.totalorder %s180, %s182
      %p186 = scmp.eq.s32.totalorder %s20, 0
      %p187 = por %p185, %p186
      %p188 = scmp.ne.s32.totalorder %s180, %s182
      %p189 = scmp.eq.s32.totalorder %s25, 1
      %p190 = por %p188, %p189
      %p191 = scmp.ne.s32.totalorder %s182, %s183
      %p192 = scmp.eq.s32.totalorder %s25, 0
      %p193 = por %p191, %p192
      %p194 = scmp.ne.s32.totalorder %s182, %s183
      %p195 = scmp.eq.s32.totalorder %s26, 1
      %p196 = por %p194, %p195
      %p198 = scmp.ne.s32.totalorder %s183, %s197
      %p199 = scmp.eq.s32.totalorder %s26, 0
      %p200 = por %p198, %p199
      %s202 = sadd.s32 %s201, 1
      %p205 = scmp.eq.s32.totalorder %s20, 1
      %p206 = scmp.ne.s32.totalorder %s201, %s203
      %p207 = scmp.eq.s32.totalorder %s20, 0
      %p208 = por %p206, %p207
      %p209 = scmp.ne.s32.totalorder %s201, %s203
      %p210 = scmp.eq.s32.totalorder %s25, 1
      %p211 = por %p209, %p210
      %p212 = scmp.ne.s32.totalorder %s203, %s204
      %p213 = scmp.eq.s32.totalorder %s25, 0
      %p214 = por %p212, %p213
      %p215 = scmp.ne.s32.totalorder %s203, %s204
      %p216 = scmp.eq.s32.totalorder %s26, 1
      %p217 = por %p215, %p216
      %p219 = scmp.ne.s32.totalorder %s204, %s218
      %p220 = scmp.eq.s32.totalorder %s26, 0
      %p221 = por %p219, %p220
      %s223 = sadd.s32 %s222, 1
      %p226 = scmp.eq.s32.totalorder %s20, 1
      %p227 = scmp.ne.s32.totalorder %s222, %s224
      %p228 = scmp.eq.s32.totalorder %s20, 0
      %p229 = por %p227, %p228
      %p230 = scmp.ne.s32.totalorder %s222, %s224
      %p231 = scmp.eq.s32.totalorder %s25, 1
      %p232 = por %p230, %p231
      %p233 = scmp.ne.s32.totalorder %s224, %s225
      %p234 = scmp.eq.s32.totalorder %s25, 0
      %p235 = por %p233, %p234
      %p236 = scmp.ne.s32.totalorder %s224, %s225
      %p237 = scmp.eq.s32.totalorder %s26, 1
      %p238 = por %p236, %p237
      %p240 = scmp.ne.s32.totalorder %s225, %s239
      %p241 = scmp.eq.s32.totalorder %s26, 0
      %p242 = por %p240, %p241
      %s244 = sadd.s32 %s243, 1
      %p247 = scmp.eq.s32.totalorder %s20, 1
      %p248 = scmp.ne.s32.totalorder %s243, %s245
      %p249 = scmp.eq.s32.totalorder %s20, 0
      %p250 = por %p248, %p249
      %p251 = scmp.ne.s32.totalorder %s243, %s245
      %p252 = scmp.eq.s32.totalorder %s25, 1
      %p253 = por %p251, %p252
      %p254 = scmp.ne.s32.totalorder %s245, %s246
      %p255 = scmp.eq.s32.totalorder %s25, 0
      %p256 = por %p254, %p255
      %p257 = scmp.ne.s32.totalorder %s245, %s246
      %p258 = scmp.eq.s32.totalorder %s26, 1
      %p259 = por %p257, %p258
      %p261 = scmp.ne.s32.totalorder %s246, %s260
      %p262 = scmp.eq.s32.totalorder %s26, 0
      %p263 = por %p261, %p262
      %s264 = ssub.s32 %s20, %s27
      %p265 = scmp.eq.s32.totalorder %s264, 0
      %s267 = sadd.s32 %s266, 1
      %s268 = scalar_select %p265, %s266, %s267
      %p271 = pneg %p265
      %p272 = scmp.eq.s32.totalorder %s20, 1
      %p273 = por %p271, %p272
      %p274 = scmp.ne.s32.totalorder %s266, %s269
      %p275 = scmp.eq.s32.totalorder %s20, 0
      %p276 = por %p274, %p275
      %p277 = scmp.ne.s32.totalorder %s266, %s269
      %p278 = scmp.eq.s32.totalorder %s25, 1
      %p279 = por %p277, %p278
      %p280 = scmp.ne.s32.totalorder %s269, %s270
      %p281 = scmp.eq.s32.totalorder %s25, 0
      %p282 = por %p280, %p281
      %p283 = scmp.ne.s32.totalorder %s269, %s270
      %p284 = scmp.eq.s32.totalorder %s26, 1
      %p285 = por %p283, %p284
      %p287 = scmp.ne.s32.totalorder %s270, %s286
      %p288 = scmp.eq.s32.totalorder %s26, 0
      %p289 = por %p287, %p288
      %p290 = scmp.le.s32.totalorder 1, %s20
      %p291 = scmp.lt.s32.totalorder %s20, 3
      %p292 = pnand %p290, %p291
      %p293 = pneg %p292
      // Predicated region
      $region9: #{tpu_custom_call.1} parent=5 // pred_check
        _
      $region10: #{tpu_custom_call.1} parent=5 // pred_check_branch
        %295 = sbr.rel (%p292) target = $region12
      $region11: #{tpu_custom_call.1} parent=5 // pred_region
        %s296 = ssub.s32 %s20, 1
        // Predicated region
        $region13: #{tpu_custom_call.1} parent=11 // pred_check
          %p297 = pneg %p67
        $region14: #{tpu_custom_call.1} parent=11 // pred_check_branch
          %299 = sbr.rel (%p297) target = $region16
        $region15: #{tpu_custom_call.1} parent=11 // pred_region
          _
        $region16: #{tpu_custom_call.1} parent=11 // pred_fallthru
          _
        // Predicated region
        $region17: #{tpu_custom_call.1} parent=11 // pred_check
          %p300 = pneg %p88
        $region18: #{tpu_custom_call.1} parent=11 // pred_check_branch
          %302 = sbr.rel (%p300) target = $region20
        $region19: #{tpu_custom_call.1} parent=11 // pred_region
          _
        $region20: #{tpu_custom_call.1} parent=11 // pred_fallthru
          _
        // Predicated region
        $region21: #{tpu_custom_call.1} parent=11 // pred_check
          %p303 = pneg %p109
        $region22: #{tpu_custom_call.1} parent=11 // pred_check_branch
          %305 = sbr.rel (%p303) target = $region24
        $region23: #{tpu_custom_call.1} parent=11 // pred_region
          _
        $region24: #{tpu_custom_call.1} parent=11 // pred_fallthru
          _
        // Predicated region
        $region25: #{tpu_custom_call.1} parent=11 // pred_check
          %p306 = pneg %p130
        $region26: #{tpu_custom_call.1} parent=11 // pred_check_branch
          %308 = sbr.rel (%p306) target = $region28
        $region27: #{tpu_custom_call.1} parent=11 // pred_region
          _
        $region28: #{tpu_custom_call.1} parent=11 // pred_fallthru
          _
        // Predicated region
        $region29: #{tpu_custom_call.1} parent=11 // pred_check
          %p309 = pneg %p151
        $region30: #{tpu_custom_call.1} parent=11 // pred_check_branch
          %311 = sbr.rel (%p309) target = $region32
        $region31: #{tpu_custom_call.1} parent=11 // pred_region
          _
        $region32: #{tpu_custom_call.1} parent=11 // pred_fallthru
          _
        // Predicated region
        $region33: #{tpu_custom_call.1} parent=11 // pred_check
          %p312 = pneg %p172
        $region34: #{tpu_custom_call.1} parent=11 // pred_check_branch
          %314 = sbr.rel (%p312) target = $region36
        $region35: #{tpu_custom_call.1} parent=11 // pred_region
          _
        $region36: #{tpu_custom_call.1} parent=11 // pred_fallthru
          _
        // Predicated region
        $region37: #{tpu_custom_call.1} parent=11 // pred_check
          %p315 = pneg %p193
        $region38: #{tpu_custom_call.1} parent=11 // pred_check_branch
          %317 = sbr.rel (%p315) target = $region40
        $region39: #{tpu_custom_call.1} parent=11 // pred_region
          _
        $region40: #{tpu_custom_call.1} parent=11 // pred_fallthru
          _
        // Predicated region
        $region41: #{tpu_custom_call.1} parent=11 // pred_check
          %p318 = pneg %p214
        $region42: #{tpu_custom_call.1} parent=11 // pred_check_branch
          %320 = sbr.rel (%p318) target = $region44
        $region43: #{tpu_custom_call.1} parent=11 // pred_region
          _
        $region44: #{tpu_custom_call.1} parent=11 // pred_fallthru
          _
        // Predicated region
        $region45: #{tpu_custom_call.1} parent=11 // pred_check
          %p321 = pneg %p235
        $region46: #{tpu_custom_call.1} parent=11 // pred_check_branch
          %323 = sbr.rel (%p321) target = $region48
        $region47: #{tpu_custom_call.1} parent=11 // pred_region
          _
        $region48: #{tpu_custom_call.1} parent=11 // pred_fallthru
          _
        // Predicated region
        $region49: #{tpu_custom_call.1} parent=11 // pred_check
          %p324 = pneg %p256
        $region50: #{tpu_custom_call.1} parent=11 // pred_check_branch
          %326 = sbr.rel (%p324) target = $region52
        $region51: #{tpu_custom_call.1} parent=11 // pred_region
          _
        $region52: #{tpu_custom_call.1} parent=11 // pred_fallthru
          _
      $region12: #{tpu_custom_call.1} parent=5 // pred_fallthru
        _
      %p327 = scmp.lt.s32.totalorder %s20, 2
      // Predicated region
      $region53: #{tpu_custom_call.1} parent=5 // pred_check
        %p328 = pneg %p327
      $region54: #{tpu_custom_call.1} parent=5 // pred_check_branch
        %330 = sbr.rel (%p328) target = $region56
      $region55: #{tpu_custom_call.1} parent=5 // pred_region
        // Predicated region
        $region57: #{tpu_custom_call.1} parent=55 // pred_check
          %p331 = pneg %p40
        $region58: #{tpu_custom_call.1} parent=55 // pred_check_branch
          %333 = sbr.rel (%p331) target = $region60
        $region59: #{tpu_custom_call.1} parent=55 // pred_region
          %s334 = smul.u32 2, %s20
          %p335 = scmp.lt.s32.totalorder %s334, 3
          %s336 = scalar_select %p335, %s334, 3
          %s337 = smul.addr %s336, 2
          %s338 = smul.addr %s337, 8
          %s339 = scalar_lea.vmem %s0, %s338
          %s340 = smul.u32 2, %s20
        $region60: #{tpu_custom_call.1} parent=55 // pred_fallthru
          _
      $region56: #{tpu_custom_call.1} parent=5 // pred_fallthru
        _
      %p341 = scmp.le.s32.totalorder 1, %s20
      %p342 = scmp.lt.s32.totalorder %s20, 3
      %p343 = pnand %p341, %p342
      %p344 = pneg %p343
      // Predicated region
      $region61: #{tpu_custom_call.1} parent=5 // pred_check
        _
      $region62: #{tpu_custom_call.1} parent=5 // pred_check_branch
        %346 = sbr.rel (%p343) target = $region64
      $region63: #{tpu_custom_call.1} parent=5 // pred_region
        %s347 = ssub.s32 %s20, 1
        %s348 = smul.u32 2, %s25
        %p349 = scmp.lt.s32.totalorder %s348, 3
        %s350 = scalar_select %p349, %s348, 3
        %s351 = smul.addr %s350, 2
        %s352 = smul.addr %s351, 8
        %s353 = scalar_lea.vmem %s0, %s352
        %p354 = pneg %p46
        %p355 = pneg %p43
        %p356 = pneg %p67
        %p357 = pneg %p64
        %p358 = pneg %p88
        %p359 = pneg %p85
        %p360 = pneg %p109
        %p361 = pneg %p106
        %p362 = pneg %p130
        %p363 = pneg %p127
        %p364 = pneg %p151
        %p365 = pneg %p148
        %p366 = pneg %p172
        %p367 = pneg %p169
        %p368 = pneg %p193
        %p369 = pneg %p190
        %p370 = pneg %p214
        %p371 = pneg %p211
        %p372 = pneg %p235
        %p373 = pneg %p232
        %p374 = pneg %p256
        %p375 = pneg %p253
        %p376 = pneg %p282
        %p377 = pneg %p279
        %s378 = sand.u32 %s269, 1
        %s379 = scalar_lea.sflag [#allocation3], %s378
        %s380 = sand.u32 %s269, 1
        %s381 = smul.addr %s380, 32
        %s382 = scalar_lea.vmem [#allocation2], %s381
        %s383 = smul.u32 2, %s25
        %p384 = scmp.lt.s32.totalorder %s383, 3
        %s385 = scalar_select %p384, %s383, 3
        %s386 = smul.addr %s385, 2
        %s387 = smul.addr %s386, 8
        %s388 = scalar_lea.vmem %s0, %s387
        %s389 = smul.u32 2, %s25
        %s390 = smul.u32 2, %s25
        %v392 = vld [vmem:[%s388] sm:$0xff]
        %v393 = vld [vmem:[%s388 + $0x8] sm:$0xff]
        %v394 = vld [vmem:[%s388 + $0x10] sm:$0xff]
        %v395 = vld [vmem:[%s388 + $0x18] sm:$0xff]
        %v396 = vpack.c.bf16 %v393, %v392
        %v397 = vpack.c.bf16 %v395, %v394
        %v398 = vld [vmem:[%s1] sm:$0xff]
        %v399 = vld [vmem:[%s1 + $0x8] sm:$0xff]
        %v400 = vld [vmem:[%s1 + $0x10] sm:$0xff]
        %v401 = vld [vmem:[%s1 + $0x18] sm:$0xff]
        %v406 = vunpack.c.l.b16 %v398
        %v407 = vunpack.c.h.b16 %v398
        %v408 = vunpack.c.l.b16 %v399
        %v409 = vunpack.c.h.b16 %v399
        %v410 = vunpack.c.l.b16 %v400
        %v411 = vunpack.c.h.b16 %v400
        %v412 = vunpack.c.l.b16 %v401
        %v413 = vunpack.c.h.b16 %v401
        %v414 = vpack.c.b16 %v408, %v406
        %v415 = vpack.c.b16 %v409, %v407
        %v416 = vpack.c.b16 %v412, %v410
        %v417 = vpack.c.b16 %v413, %v411
        %vm422 = vcmask 261120
        %v424 = vsel %vm422, %v396, 0
        %v427 = vsel %vm422, %v397, 0
        %429 = vmatprep.subr.bf16.mxu0 %v415
        %430 = vmatpush1.bf16.msra.mxu0 %v414
        %431 = vmatprep.subr.bf16.mxu0 %v417
        %432 = vmatpush1.bf16.msra.mxu0 %v416
        %433 = vmatprep.subr.bf16.mxu0 0
        %434 = vmatpush1.bf16.msra.mxu0 0
        %435 = vmatprep.subr.bf16.mxu0 0
        %436 = vmatpush1.bf16.msra.mxu0 0
        %437 = vmatprep.subr.bf16.mxu0 0
        %438 = vmatpush1.bf16.msra.mxu0 0
        %439 = vmatprep.subr.bf16.mxu0 0
        %440 = vmatpush1.bf16.msra.mxu0 0
        %441 = vmatprep.subr.bf16.mxu0 0
        %442 = vmatpush1.bf16.msra.mxu0 0
        %443 = vmatprep.subr.bf16.mxu0 0
        %444 = vmatpush1.bf16.msra.mxu0 0
        %445 = vmatprep.subr.bf16.mxu0 0
        %446 = vmatpush1.bf16.msra.mxu0 0
        %447 = vmatprep.subr.bf16.mxu0 0
        %448 = vmatpush1.bf16.msra.mxu0 0
        %449 = vmatprep.subr.bf16.mxu0 0
        %450 = vmatpush1.bf16.msra.mxu0 0
        %451 = vmatprep.subr.bf16.mxu0 0
        %452 = vmatpush1.bf16.msra.mxu0 0
        %453 = vmatprep.subr.bf16.mxu0 0
        %454 = vmatpush1.bf16.msra.mxu0 0
        %455 = vmatprep.subr.bf16.mxu0 0
        %456 = vmatpush1.bf16.msra.mxu0 0
        %457 = vmatprep.subr.bf16.mxu0 0
        %458 = vmatpush1.bf16.msra.mxu0 0
        %459 = vmatprep.subr.bf16.mxu0 0
        %460 = vmatpush1.bf16.msra.mxu0 0
        %461 = vmatprep.mubr.bf16.mxu0 0
        %462 = vmatmul.mubr.bf16.gmra.mrb[0].mxu0 %v424
        %v463 = vpop.f32.mrb[0].mxu0
        %v464 = vadd.f32 0.0, %v463
        %v465 = vpop.f32.mrb[0].mxu0
        %v466 = vadd.f32 0.0, %v465
        %v467 = vpop.f32.mrb[0].mxu0
        %v468 = vadd.f32 0.0, %v467
        %v469 = vpop.f32.mrb[0].mxu0
        %v470 = vadd.f32 0.0, %v469
        %471 = vmatprep.mubr.bf16.mxu0 0
        %472 = vmatmul.mubr.bf16.gmra.mrb[0].mxu0 %v427
        %v473 = vpop.f32.mrb[0].mxu0
        %v474 = vadd.f32 0.0, %v473
        %v475 = vpop.f32.mrb[0].mxu0
        %v476 = vadd.f32 0.0, %v475
        %v477 = vpop.f32.mrb[0].mxu0
        %v478 = vadd.f32 0.0, %v477
        %v479 = vpop.f32.mrb[0].mxu0
        %v480 = vadd.f32 0.0, %v479
        %481 = vdwg.mxu0
        %v482 = vpack.c.bf16 %v468, %v464
        %v483 = vpack.c.bf16 %v470, %v466
        %485 = vrot.lane.b32.xlu0 %v482, 64
        %v486 = vpop.permute.xlu0 %485
        %v488 = vsel %vm422, %v482, 0
        %v491 = vsel %vm422, %v486, 0
        %493 = vmatprep.subr.bf16.mxu0 0
        %494 = vmatpush1.bf16.xpose.msra.mxu0 %v491
        %495 = vmatprep.subr.bf16.mxu0 0
        %496 = vmatpush1.bf16.xpose.msra.mxu0 0
        %497 = vmatprep.subr.bf16.mxu0 0
        %498 = vmatpush1.bf16.xpose.msra.mxu0 0
        %499 = vmatprep.subr.bf16.mxu0 0
        %500 = vmatpush1.bf16.xpose.msra.mxu0 0
        %501 = vmatprep.subr.bf16.mxu0 0
        %502 = vmatpush1.bf16.xpose.msra.mxu0 0
        %503 = vmatprep.subr.bf16.mxu0 0
        %504 = vmatpush1.bf16.xpose.msra.mxu0 0
        %505 = vmatprep.subr.bf16.mxu0 0
        %506 = vmatpush1.bf16.xpose.msra.mxu0 0
        %507 = vmatprep.subr.bf16.mxu0 0
        %508 = vmatpush1.bf16.xpose.msra.mxu0 0
        %509 = vmatprep.subr.bf16.mxu0 0
        %510 = vmatpush1.bf16.xpose.msra.mxu0 0
        %511 = vmatprep.subr.bf16.mxu0 0
        %512 = vmatpush1.bf16.xpose.msra.mxu0 0
        %513 = vmatprep.subr.bf16.mxu0 0
        %514 = vmatpush1.bf16.xpose.msra.mxu0 0
        %515 = vmatprep.subr.bf16.mxu0 0
        %516 = vmatpush1.bf16.xpose.msra.mxu0 0
        %517 = vmatprep.subr.bf16.mxu0 0
        %518 = vmatpush1.bf16.xpose.msra.mxu0 0
        %519 = vmatprep.subr.bf16.mxu0 0
        %520 = vmatpush1.bf16.xpose.msra.mxu0 0
        %521 = vmatprep.subr.bf16.mxu0 0
        %522 = vmatpush1.bf16.xpose.msra.mxu0 0
        %523 = vmatprep.subr.bf16.mxu0 0
        %524 = vmatpush1.bf16.xpose.msra.mxu0 0
        %525 = vmatprep.mubr.bf16.mxu0 0
        %526 = vmatmul.mubr.bf16.gmra.mrb[0].mxu0 %v488
        %v527 = vpop.f32.mrb[0].mxu0
        %v528 = vadd.f32 0.0, %v527
        %v529 = vpop.f32.mrb[0].mxu0
        %v530 = vpop.f32.mrb[0].mxu0
        %v531 = vadd.f32 0.0, %v530
        %v532 = vpop.f32.mrb[0].mxu0
        %533 = vdwg.mxu0
        %vm534 = vcmask 130048
        %v535 = vsel %vm534, %v528, -inf
        %536 = vmax.xlane.f32.xlu0 %v535
        %v537 = vpop.xlane.xlu0 %536
        %v538 = vsel %vm534, %v531, -inf
        %539 = vmax.xlane.f32.xlu0 %v538
        %v540 = vpop.xlane.xlu0 %539
        %v541 = vsub.f32 %v528, %v537
        %v542 = vsub.f32 %v531, %v540
        %v543 = vmul.f32 %v541, 1.442695
        %v544 = vpow.pop %v543
        %v545 = vmul.f32 %v542, 1.442695
        %v546 = vpow.pop %v545
        %v547 = vsel %vm534, %v544, 0.0
        %548 = vadd.xlane.f32.xlu0 %v547
        %v549 = vpop.xlane.xlu0 %548
        %v550 = vsel %vm534, %v546, 0.0
        %551 = vadd.xlane.f32.xlu0 %v550
        %v552 = vpop.xlane.xlu0 %551
        %v553 = vrcp.pop %v549
        %v554 = vrcp.pop %v552
        %v555 = vmul.f32 %v544, %v553
        %v556 = vmul.f32 %v546, %v554
        %v557 = vpack.c.bf16 %v556, %v555
        %v559 = vsel %vm534, %v557, 0
        %561 = vmatprep.subr.bf16.mxu0 0
        %562 = vmatpush1.bf16.msra.mxu0 %v483
        %563 = vmatprep.subr.bf16.mxu0 0
        %564 = vmatpush1.bf16.msra.mxu0 0
        %565 = vmatprep.subr.bf16.mxu0 0
        %566 = vmatpush1.bf16.msra.mxu0 0
        %567 = vmatprep.subr.bf16.mxu0 0
        %568 = vmatpush1.bf16.msra.mxu0 0
        %569 = vmatprep.subr.bf16.mxu0 0
        %570 = vmatpush1.bf16.msra.mxu0 0
        %571 = vmatprep.subr.bf16.mxu0 0
        %572 = vmatpush1.bf16.msra.mxu0 0
        %573 = vmatprep.subr.bf16.mxu0 0
        %574 = vmatpush1.bf16.msra.mxu0 0
        %575 = vmatprep.subr.bf16.mxu0 0
        %576 = vmatpush1.bf16.msra.mxu0 0
        %577 = vmatprep.subr.bf16.mxu0 0
        %578 = vmatpush1.bf16.msra.mxu0 0
        %579 = vmatprep.subr.bf16.mxu0 0
        %580 = vmatpush1.bf16.msra.mxu0 0
        %581 = vmatprep.subr.bf16.mxu0 0
        %582 = vmatpush1.bf16.msra.mxu0 0
        %583 = vmatprep.subr.bf16.mxu0 0
        %584 = vmatpush1.bf16.msra.mxu0 0
        %585 = vmatprep.subr.bf16.mxu0 0
        %586 = vmatpush1.bf16.msra.mxu0 0
        %587 = vmatprep.subr.bf16.mxu0 0
        %588 = vmatpush1.bf16.msra.mxu0 0
        %589 = vmatprep.subr.bf16.mxu0 0
        %590 = vmatpush1.bf16.msra.mxu0 0
        %591 = vmatprep.subr.bf16.mxu0 0
        %592 = vmatpush1.bf16.msra.mxu0 0
        %593 = vmatprep.mubr.bf16.mxu0 0
        %594 = vmatmul.mubr.bf16.gmra.mrb[0].mxu0 %v559
        %v595 = vpop.f32.mrb[0].mxu0
        %v596 = vadd.f32 0.0, %v595
        %v597 = vpop.f32.mrb[0].mxu0
        %v598 = vpop.f32.mrb[0].mxu0
        %v599 = vadd.f32 0.0, %v598
        %v600 = vpop.f32.mrb[0].mxu0
        %601 = vdwg.mxu0
        %v602 = vpack.c.bf16 %v599, %v596
        %v603 = vld [vmem:[%s2] sm:$0xf]
        %v604 = vld [vmem:[%s2 + $0x4] sm:$0xf]
        %v605 = vld [vmem:[%s2 + $0x8] sm:$0xf]
        %v606 = vld [vmem:[%s2 + $0xc] sm:$0xf]
        %607 = vrot.lane.b32.xlu0 %v482, 96
        %v608 = vpop.permute.xlu0 %607
        %609 = vrot.lane.b32.xlu0 %v482, 32
        %v610 = vpop.permute.xlu0 %609
        %v612 = vsel %vm422, %v608, 0
        %v615 = vsel %vm422, %v610, 0
        %617 = vmatprep.subr.bf16.mxu0 0
        %618 = vmatpush1.bf16.xpose.msra.mxu0 %v615
        %619 = vmatprep.subr.bf16.mxu0 0
        %620 = vmatpush1.bf16.xpose.msra.mxu0 0
        %621 = vmatprep.subr.bf16.mxu0 0
        %622 = vmatpush1.bf16.xpose.msra.mxu0 0
        %623 = vmatprep.subr.bf16.mxu0 0
        %624 = vmatpush1.bf16.xpose.msra.mxu0 0
        %625 = vmatprep.subr.bf16.mxu0 0
        %626 = vmatpush1.bf16.xpose.msra.mxu0 0
        %627 = vmatprep.subr.bf16.mxu0 0
        %628 = vmatpush1.bf16.xpose.msra.mxu0 0
        %629 = vmatprep.subr.bf16.mxu0 0
        %630 = vmatpush1.bf16.xpose.msra.mxu0 0
        %631 = vmatprep.subr.bf16.mxu0 0
        %632 = vmatpush1.bf16.xpose.msra.mxu0 0
        %633 = vmatprep.subr.bf16.mxu0 0
        %634 = vmatpush1.bf16.xpose.msra.mxu0 0
        %635 = vmatprep.subr.bf16.mxu0 0
        %636 = vmatpush1.bf16.xpose.msra.mxu0 0
        %637 = vmatprep.subr.bf16.mxu0 0
        %638 = vmatpush1.bf16.xpose.msra.mxu0 0
        %639 = vmatprep.subr.bf16.mxu0 0
        %640 = vmatpush1.bf16.xpose.msra.mxu0 0
        %641 = vmatprep.subr.bf16.mxu0 0
        %642 = vmatpush1.bf16.xpose.msra.mxu0 0
        %643 = vmatprep.subr.bf16.mxu0 0
        %644 = vmatpush1.bf16.xpose.msra.mxu0 0
        %645 = vmatprep.subr.bf16.mxu0 0
        %646 = vmatpush1.bf16.xpose.msra.mxu0 0
        %647 = vmatprep.subr.bf16.mxu0 0
        %648 = vmatpush1.bf16.xpose.msra.mxu0 0
        %649 = vmatprep.mubr.bf16.mxu0 0
        %650 = vmatmul.mubr.bf16.gmra.mrb[0].mxu0 %v612
        %v651 = vpop.f32.mrb[0].mxu0
        %v652 = vadd.f32 0.0, %v651
        %v653 = vpop.f32.mrb[0].mxu0
        %v654 = vpop.f32.mrb[0].mxu0
        %v655 = vadd.f32 0.0, %v654
        %v656 = vpop.f32.mrb[0].mxu0
        %657 = vdwg.mxu0
        %v658 = vsel %vm534, %v652, -inf
        %659 = vmax.xlane.f32.xlu0 %v658
        %v660 = vpop.xlane.xlu0 %659
        %v661 = vsel %vm534, %v655, -inf
        %662 = vmax.xlane.f32.xlu0 %v661
        %v663 = vpop.xlane.xlu0 %662
        %v664 = vsub.f32 %v652, %v660
        %v665 = vsub.f32 %v655, %v663
        %v666 = vmul.f32 %v664, 1.442695
        %v667 = vpow.pop %v666
        %v668 = vmul.f32 %v665, 1.442695
        %v669 = vpow.pop %v668
        %v670 = vsel %vm534, %v667, 0.0
        %671 = vadd.xlane.f32.xlu0 %v670
        %v672 = vpop.xlane.xlu0 %671
        %v673 = vsel %vm534, %v669, 0.0
        %674 = vadd.xlane.f32.xlu0 %v673
        %v675 = vpop.xlane.xlu0 %674
        %v676 = vrcp.pop %v672
        %v677 = vrcp.pop %v675
        %v678 = vmul.f32 %v667, %v676
        %v679 = vmul.f32 %v669, %v677
        %v680 = vpack.c.bf16 %v679, %v678
        %682 = vrot.lane.b32.xlu0 %v483, 96
        %v683 = vpop.permute.xlu0 %682
        %v686 = vsel %vm534, %v680, 0
        %688 = vmatprep.subr.bf16.mxu0 0
        %689 = vmatpush1.bf16.msra.mxu0 %v683
        %690 = vmatprep.subr.bf16.mxu0 0
        %691 = vmatpush1.bf16.msra.mxu0 0
        %692 = vmatprep.subr.bf16.mxu0 0
        %693 = vmatpush1.bf16.msra.mxu0 0
        %694 = vmatprep.subr.bf16.mxu0 0
        %695 = vmatpush1.bf16.msra.mxu0 0
        %696 = vmatprep.subr.bf16.mxu0 0
        %697 = vmatpush1.bf16.msra.mxu0 0
        %698 = vmatprep.subr.bf16.mxu0 0
        %699 = vmatpush1.bf16.msra.mxu0 0
        %700 = vmatprep.subr.bf16.mxu0 0
        %701 = vmatpush1.bf16.msra.mxu0 0
        %702 = vmatprep.subr.bf16.mxu0 0
        %703 = vmatpush1.bf16.msra.mxu0 0
        %704 = vmatprep.subr.bf16.mxu0 0
        %705 = vmatpush1.bf16.msra.mxu0 0
        %706 = vmatprep.subr.bf16.mxu0 0
        %707 = vmatpush1.bf16.msra.mxu0 0
        %708 = vmatprep.subr.bf16.mxu0 0
        %709 = vmatpush1.bf16.msra.mxu0 0
        %710 = vmatprep.subr.bf16.mxu0 0
        %711 = vmatpush1.bf16.msra.mxu0 0
        %712 = vmatprep.subr.bf16.mxu0 0
        %713 = vmatpush1.bf16.msra.mxu0 0
        %714 = vmatprep.subr.bf16.mxu0 0
        %715 = vmatpush1.bf16.msra.mxu0 0
        %716 = vmatprep.subr.bf16.mxu0 0
        %717 = vmatpush1.bf16.msra.mxu0 0
        %718 = vmatprep.subr.bf16.mxu0 0
        %719 = vmatpush1.bf16.msra.mxu0 0
        %720 = vmatprep.mubr.bf16.mxu0 0
        %721 = vmatmul.mubr.bf16.gmra.mrb[0].mxu0 %v686
        %v722 = vpop.f32.mrb[0].mxu0
        %v723 = vadd.f32 0.0, %v722
        %v724 = vpop.f32.mrb[0].mxu0
        %v725 = vpop.f32.mrb[0].mxu0
        %v726 = vadd.f32 0.0, %v725
        %v727 = vpop.f32.mrb[0].mxu0
        %728 = vdwg.mxu0
        %v729 = vpack.c.bf16 %v726, %v723
        %v730 = vld [vmem:[%s2 + $0x10] sm:$0xf]
        %v731 = vld [vmem:[%s2 + $0x14] sm:$0xf]
        %v732 = vld [vmem:[%s2 + $0x18] sm:$0xf]
        %v733 = vld [vmem:[%s2 + $0x1c] sm:$0xf]
        %v738 = vunpack.c.l.b16 %v730
        %v739 = vunpack.c.l.b16 %v731
        %v740 = vunpack.c.l.b16 %v732
        %v741 = vunpack.c.l.b16 %v733
        %v742 = vpack.c.b16 %v739, %v738
        %v743 = vpack.c.b16 %v741, %v740
        %v747 = vsel %vm422, %v729, 0
        %749 = vmatprep.subr.bf16.mxu0 0
        %750 = vmatpush1.bf16.msra.mxu0 %v742
        %751 = vmatprep.subr.bf16.mxu0 0
        %752 = vmatpush1.bf16.msra.mxu0 %v743
        %753 = vmatprep.subr.bf16.mxu0 0
        %754 = vmatpush1.bf16.msra.mxu0 0
        %755 = vmatprep.subr.bf16.mxu0 0
        %756 = vmatpush1.bf16.msra.mxu0 0
        %757 = vmatprep.subr.bf16.mxu0 0
        %758 = vmatpush1.bf16.msra.mxu0 0
        %759 = vmatprep.subr.bf16.mxu0 0
        %760 = vmatpush1.bf16.msra.mxu0 0
        %761 = vmatprep.subr.bf16.mxu0 0
        %762 = vmatpush1.bf16.msra.mxu0 0
        %763 = vmatprep.subr.bf16.mxu0 0
        %764 = vmatpush1.bf16.msra.mxu0 0
        %765 = vmatprep.subr.bf16.mxu0 0
        %766 = vmatpush1.bf16.msra.mxu0 0
        %767 = vmatprep.subr.bf16.mxu0 0
        %768 = vmatpush1.bf16.msra.mxu0 0
        %769 = vmatprep.subr.bf16.mxu0 0
        %770 = vmatpush1.bf16.msra.mxu0 0
        %771 = vmatprep.subr.bf16.mxu0 0
        %772 = vmatpush1.bf16.msra.mxu0 0
        %773 = vmatprep.subr.bf16.mxu0 0
        %774 = vmatpush1.bf16.msra.mxu0 0
        %775 = vmatprep.subr.bf16.mxu0 0
        %776 = vmatpush1.bf16.msra.mxu0 0
        %777 = vmatprep.subr.bf16.mxu0 0
        %778 = vmatpush1.bf16.msra.mxu0 0
        %779 = vmatprep.subr.bf16.mxu0 0
        %780 = vmatpush1.bf16.msra.mxu0 0
        %781 = vmatprep.mubr.bf16.mxu0 0
        %782 = vmatmul.mubr.bf16.gmra.mrb[0].mxu0 %v747
        %v783 = vpop.f32.mrb[0].mxu0
        %v784 = vadd.f32 0.0, %v783
        %v785 = vpop.f32.mrb[0].mxu0
        %v786 = vpop.f32.mrb[0].mxu0
        %v787 = vadd.f32 0.0, %v786
        %v788 = vpop.f32.mrb[0].mxu0
        %789 = vdwg.mxu0
        %v794 = vunpack.c.l.b16 %v603
        %v795 = vunpack.c.l.b16 %v604
        %v796 = vunpack.c.l.b16 %v605
        %v797 = vunpack.c.l.b16 %v606
        %v798 = vpack.c.b16 %v795, %v794
        %v799 = vpack.c.b16 %v797, %v796
        %v803 = vsel %vm422, %v602, 0
        %805 = vmatprep.subr.bf16.mxu0 0
        %806 = vmatpush1.bf16.msra.mxu0 %v798
        %807 = vmatprep.subr.bf16.mxu0 0
        %808 = vmatpush1.bf16.msra.mxu0 %v799
        %809 = vmatprep.subr.bf16.mxu0 0
        %810 = vmatpush1.bf16.msra.mxu0 0
        %811 = vmatprep.subr.bf16.mxu0 0
        %812 = vmatpush1.bf16.msra.mxu0 0
        %813 = vmatprep.subr.bf16.mxu0 0
        %814 = vmatpush1.bf16.msra.mxu0 0
        %815 = vmatprep.subr.bf16.mxu0 0
        %816 = vmatpush1.bf16.msra.mxu0 0
        %817 = vmatprep.subr.bf16.mxu0 0
        %818 = vmatpush1.bf16.msra.mxu0 0
        %819 = vmatprep.subr.bf16.mxu0 0
        %820 = vmatpush1.bf16.msra.mxu0 0
        %821 = vmatprep.subr.bf16.mxu0 0
        %822 = vmatpush1.bf16.msra.mxu0 0
        %823 = vmatprep.subr.bf16.mxu0 0
        %824 = vmatpush1.bf16.msra.mxu0 0
        %825 = vmatprep.subr.bf16.mxu0 0
        %826 = vmatpush1.bf16.msra.mxu0 0
        %827 = vmatprep.subr.bf16.mxu0 0
        %828 = vmatpush1.bf16.msra.mxu0 0
        %829 = vmatprep.subr.bf16.mxu0 0
        %830 = vmatpush1.bf16.msra.mxu0 0
        %831 = vmatprep.subr.bf16.mxu0 0
        %832 = vmatpush1.bf16.msra.mxu0 0
        %833 = vmatprep.subr.bf16.mxu0 0
        %834 = vmatpush1.bf16.msra.mxu0 0
        %835 = vmatprep.subr.bf16.mxu0 0
        %836 = vmatpush1.bf16.msra.mxu0 0
        %837 = vmatprep.mubr.bf16.mxu0 0
        %838 = vmatmul.mubr.bf16.gmra.mrb[0].mxu0 %v803
        %v839 = vpop.f32.mrb[0].mxu0
        %v840 = vadd.f32 %v784, %v839
        %v841 = vpop.f32.mrb[0].mxu0
        %v842 = vpop.f32.mrb[0].mxu0
        %v843 = vadd.f32 %v787, %v842
        %v844 = vpop.f32.mrb[0].mxu0
        %845 = vdwg.mxu0
        %v846 = vpack.c.bf16 %v478, %v474
        %v847 = vpack.c.bf16 %v480, %v476
        %849 = vrot.lane.b32.xlu0 %v846, 64
        %v850 = vpop.permute.xlu0 %849
        %v852 = vsel %vm422, %v846, 0
        %v855 = vsel %vm422, %v850, 0
        %857 = vmatprep.subr.bf16.mxu0 0
        %858 = vmatpush1.bf16.xpose.msra.mxu0 %v855
        %859 = vmatprep.subr.bf16.mxu0 0
        %860 = vmatpush1.bf16.xpose.msra.mxu0 0
        %861 = vmatprep.subr.bf16.mxu0 0
        %862 = vmatpush1.bf16.xpose.msra.mxu0 0
        %863 = vmatprep.subr.bf16.mxu0 0
        %864 = vmatpush1.bf16.xpose.msra.mxu0 0
        %865 = vmatprep.subr.bf16.mxu0 0
        %866 = vmatpush1.bf16.xpose.msra.mxu0 0
        %867 = vmatprep.subr.bf16.mxu0 0
        %868 = vmatpush1.bf16.xpose.msra.mxu0 0
        %869 = vmatprep.subr.bf16.mxu0 0
        %870 = vmatpush1.bf16.xpose.msra.mxu0 0
        %871 = vmatprep.subr.bf16.mxu0 0
        %872 = vmatpush1.bf16.xpose.msra.mxu0 0
        %873 = vmatprep.subr.bf16.mxu0 0
        %874 = vmatpush1.bf16.xpose.msra.mxu0 0
        %875 = vmatprep.subr.bf16.mxu0 0
        %876 = vmatpush1.bf16.xpose.msra.mxu0 0
        %877 = vmatprep.subr.bf16.mxu0 0
        %878 = vmatpush1.bf16.xpose.msra.mxu0 0
        %879 = vmatprep.subr.bf16.mxu0 0
        %880 = vmatpush1.bf16.xpose.msra.mxu0 0
        %881 = vmatprep.subr.bf16.mxu0 0
        %882 = vmatpush1.bf16.xpose.msra.mxu0 0
        %883 = vmatprep.subr.bf16.mxu0 0
        %884 = vmatpush1.bf16.xpose.msra.mxu0 0
        %885 = vmatprep.subr.bf16.mxu0 0
        %886 = vmatpush1.bf16.xpose.msra.mxu0 0
        %887 = vmatprep.subr.bf16.mxu0 0
        %888 = vmatpush1.bf16.xpose.msra.mxu0 0
        %889 = vmatprep.mubr.bf16.mxu0 0
        %890 = vmatmul.mubr.bf16.gmra.mrb[0].mxu0 %v852
        %v891 = vpop.f32.mrb[0].mxu0
        %v892 = vadd.f32 0.0, %v891
        %v893 = vpop.f32.mrb[0].mxu0
        %v894 = vpop.f32.mrb[0].mxu0
        %v895 = vadd.f32 0.0, %v894
        %v896 = vpop.f32.mrb[0].mxu0
        %897 = vdwg.mxu0
        %v898 = vsel %vm534, %v892, -inf
        %899 = vmax.xlane.f32.xlu0 %v898
        %v900 = vpop.xlane.xlu0 %899
        %v901 = vsel %vm534, %v895, -inf
        %902 = vmax.xlane.f32.xlu0 %v901
        %v903 = vpop.xlane.xlu0 %902
        %v904 = vsub.f32 %v892, %v900
        %v905 = vsub.f32 %v895, %v903
        %v906 = vmul.f32 %v904, 1.442695
        %v907 = vpow.pop %v906
        %v908 = vmul.f32 %v905, 1.442695
        %v909 = vpow.pop %v908
        %v910 = vsel %vm534, %v907, 0.0
        %911 = vadd.xlane.f32.xlu0 %v910
        %v912 = vpop.xlane.xlu0 %911
        %v913 = vsel %vm534, %v909, 0.0
        %914 = vadd.xlane.f32.xlu0 %v913
        %v915 = vpop.xlane.xlu0 %914
        %v916 = vrcp.pop %v912
        %v917 = vrcp.pop %v915
        %v918 = vmul.f32 %v907, %v916
        %v919 = vmul.f32 %v909, %v917
        %v920 = vpack.c.bf16 %v919, %v918
        %v922 = vsel %vm534, %v920, 0
        %924 = vmatprep.subr.bf16.mxu0 0
        %925 = vmatpush1.bf16.msra.mxu0 %v847
        %926 = vmatprep.subr.bf16.mxu0 0
        %927 = vmatpush1.bf16.msra.mxu0 0
        %928 = vmatprep.subr.bf16.mxu0 0
        %929 = vmatpush1.bf16.msra.mxu0 0
        %930 = vmatprep.subr.bf16.mxu0 0
        %931 = vmatpush1.bf16.msra.mxu0 0
        %932 = vmatprep.subr.bf16.mxu0 0
        %933 = vmatpush1.bf16.msra.mxu0 0
        %934 = vmatprep.subr.bf16.mxu0 0
        %935 = vmatpush1.bf16.msra.mxu0 0
        %936 = vmatprep.subr.bf16.mxu0 0
        %937 = vmatpush1.bf16.msra.mxu0 0
        %938 = vmatprep.subr.bf16.mxu0 0
        %939 = vmatpush1.bf16.msra.mxu0 0
        %940 = vmatprep.subr.bf16.mxu0 0
        %941 = vmatpush1.bf16.msra.mxu0 0
        %942 = vmatprep.subr.bf16.mxu0 0
        %943 = vmatpush1.bf16.msra.mxu0 0
        %944 = vmatprep.subr.bf16.mxu0 0
        %945 = vmatpush1.bf16.msra.mxu0 0
        %946 = vmatprep.subr.bf16.mxu0 0
        %947 = vmatpush1.bf16.msra.mxu0 0
        %948 = vmatprep.subr.bf16.mxu0 0
        %949 = vmatpush1.bf16.msra.mxu0 0
        %950 = vmatprep.subr.bf16.mxu0 0
        %951 = vmatpush1.bf16.msra.mxu0 0
        %952 = vmatprep.subr.bf16.mxu0 0
        %953 = vmatpush1.bf16.msra.mxu0 0
        %954 = vmatprep.subr.bf16.mxu0 0
        %955 = vmatpush1.bf16.msra.mxu0 0
        %956 = vmatprep.mubr.bf16.mxu0 0
        %957 = vmatmul.mubr.bf16.gmra.mrb[0].mxu0 %v922
        %v958 = vpop.f32.mrb[0].mxu0
        %v959 = vadd.f32 0.0, %v958
        %v960 = vpop.f32.mrb[0].mxu0
        %v961 = vpop.f32.mrb[0].mxu0
        %v962 = vadd.f32 0.0, %v961
        %v963 = vpop.f32.mrb[0].mxu0
        %964 = vdwg.mxu0
        %v965 = vpack.c.bf16 %v962, %v959
        %966 = vrot.lane.b32.xlu0 %v846, 96
        %v967 = vpop.permute.xlu0 %966
        %968 = vrot.lane.b32.xlu0 %v846, 32
        %v969 = vpop.permute.xlu0 %968
        %v971 = vsel %vm422, %v967, 0
        %v974 = vsel %vm422, %v969, 0
        %976 = vmatprep.subr.bf16.mxu0 0
        %977 = vmatpush1.bf16.xpose.msra.mxu0 %v974
        %978 = vmatprep.subr.bf16.mxu0 0
        %979 = vmatpush1.bf16.xpose.msra.mxu0 0
        %980 = vmatprep.subr.bf16.mxu0 0
        %981 = vmatpush1.bf16.xpose.msra.mxu0 0
        %982 = vmatprep.subr.bf16.mxu0 0
        %983 = vmatpush1.bf16.xpose.msra.mxu0 0
        %984 = vmatprep.subr.bf16.mxu0 0
        %985 = vmatpush1.bf16.xpose.msra.mxu0 0
        %986 = vmatprep.subr.bf16.mxu0 0
        %987 = vmatpush1.bf16.xpose.msra.mxu0 0
        %988 = vmatprep.subr.bf16.mxu0 0
        %989 = vmatpush1.bf16.xpose.msra.mxu0 0
        %990 = vmatprep.subr.bf16.mxu0 0
        %991 = vmatpush1.bf16.xpose.msra.mxu0 0
        %992 = vmatprep.subr.bf16.mxu0 0
        %993 = vmatpush1.bf16.xpose.msra.mxu0 0
        %994 = vmatprep.subr.bf16.mxu0 0
        %995 = vmatpush1.bf16.xpose.msra.mxu0 0
        %996 = vmatprep.subr.bf16.mxu0 0
        %997 = vmatpush1.bf16.xpose.msra.mxu0 0
        %998 = vmatprep.subr.bf16.mxu0 0
        %999 = vmatpush1.bf16.xpose.msra.mxu0 0
        %1000 = vmatprep.subr.bf16.mxu0 0
        %1001 = vmatpush1.bf16.xpose.msra.mxu0 0
        %1002 = vmatprep.subr.bf16.mxu0 0
        %1003 = vmatpush1.bf16.xpose.msra.mxu0 0
        %1004 = vmatprep.subr.bf16.mxu0 0
        %1005 = vmatpush1.bf16.xpose.msra.mxu0 0
        %1006 = vmatprep.subr.bf16.mxu0 0
        %1007 = vmatpush1.bf16.xpose.msra.mxu0 0
        %1008 = vmatprep.mubr.bf16.mxu0 0
        %1009 = vmatmul.mubr.bf16.gmra.mrb[0].mxu0 %v971
        %v1010 = vpop.f32.mrb[0].mxu0
        %v1011 = vadd.f32 0.0, %v1010
        %v1012 = vpop.f32.mrb[0].mxu0
        %v1013 = vpop.f32.mrb[0].mxu0
        %v1014 = vadd.f32 0.0, %v1013
        %v1015 = vpop.f32.mrb[0].mxu0
        %1016 = vdwg.mxu0
        %v1017 = vsel %vm534, %v1011, -inf
        %1018 = vmax.xlane.f32.xlu0 %v1017
        %v1019 = vpop.xlane.xlu0 %1018
        %v1020 = vsel %vm534, %v1014, -inf
        %1021 = vmax.xlane.f32.xlu0 %v1020
        %v1022 = vpop.xlane.xlu0 %1021
        %v1023 = vsub.f32 %v1011, %v1019
        %v1024 = vsub.f32 %v1014, %v1022
        %v1025 = vmul.f32 %v1023, 1.442695
        %v1026 = vpow.pop %v1025
        %v1027 = vmul.f32 %v1024, 1.442695
        %v1028 = vpow.pop %v1027
        %v1029 = vsel %vm534, %v1026, 0.0
        %1030 = vadd.xlane.f32.xlu0 %v1029
        %v1031 = vpop.xlane.xlu0 %1030
        %v1032 = vsel %vm534, %v1028, 0.0
        %1033 = vadd.xlane.f32.xlu0 %v1032
        %v1034 = vpop.xlane.xlu0 %1033
        %v1035 = vrcp.pop %v1031
        %v1036 = vrcp.pop %v1034
        %v1037 = vmul.f32 %v1026, %v1035
        %v1038 = vmul.f32 %v1028, %v1036
        %v1039 = vpack.c.bf16 %v1038, %v1037
        %1041 = vrot.lane.b32.xlu0 %v847, 96
        %v1042 = vpop.permute.xlu0 %1041
        %v1045 = vsel %vm534, %v1039, 0
        %1047 = vmatprep.subr.bf16.mxu0 0
        %1048 = vmatpush1.bf16.msra.mxu0 %v1042
        %1049 = vmatprep.subr.bf16.mxu0 0
        %1050 = vmatpush1.bf16.msra.mxu0 0
        %1051 = vmatprep.subr.bf16.mxu0 0
        %1052 = vmatpush1.bf16.msra.mxu0 0
        %1053 = vmatprep.subr.bf16.mxu0 0
        %1054 = vmatpush1.bf16.msra.mxu0 0
        %1055 = vmatprep.subr.bf16.mxu0 0
        %1056 = vmatpush1.bf16.msra.mxu0 0
        %1057 = vmatprep.subr.bf16.mxu0 0
        %1058 = vmatpush1.bf16.msra.mxu0 0
        %1059 = vmatprep.subr.bf16.mxu0 0
        %1060 = vmatpush1.bf16.msra.mxu0 0
        %1061 = vmatprep.subr.bf16.mxu0 0
        %1062 = vmatpush1.bf16.msra.mxu0 0
        %1063 = vmatprep.subr.bf16.mxu0 0
        %1064 = vmatpush1.bf16.msra.mxu0 0
        %1065 = vmatprep.subr.bf16.mxu0 0
        %1066 = vmatpush1.bf16.msra.mxu0 0
        %1067 = vmatprep.subr.bf16.mxu0 0
        %1068 = vmatpush1.bf16.msra.mxu0 0
        %1069 = vmatprep.subr.bf16.mxu0 0
        %1070 = vmatpush1.bf16.msra.mxu0 0
        %1071 = vmatprep.subr.bf16.mxu0 0
        %1072 = vmatpush1.bf16.msra.mxu0 0
        %1073 = vmatprep.subr.bf16.mxu0 0
        %1074 = vmatpush1.bf16.msra.mxu0 0
        %1075 = vmatprep.subr.bf16.mxu0 0
        %1076 = vmatpush1.bf16.msra.mxu0 0
        %1077 = vmatprep.subr.bf16.mxu0 0
        %1078 = vmatpush1.bf16.msra.mxu0 0
        %1079 = vmatprep.mubr.bf16.mxu0 0
        %1080 = vmatmul.mubr.bf16.gmra.mrb[0].mxu0 %v1045
        %v1081 = vpop.f32.mrb[0].mxu0
        %v1082 = vadd.f32 0.0, %v1081
        %v1083 = vpop.f32.mrb[0].mxu0
        %v1084 = vpop.f32.mrb[0].mxu0
        %v1085 = vadd.f32 0.0, %v1084
        %v1086 = vpop.f32.mrb[0].mxu0
        %1087 = vdwg.mxu0
        %v1088 = vpack.c.bf16 %v1085, %v1082
        %v1090 = vsel %vm422, %v1088, 0
        %1092 = vmatprep.subr.bf16.mxu0 0
        %1093 = vmatpush1.bf16.msra.mxu0 %v742
        %1094 = vmatprep.subr.bf16.mxu0 0
        %1095 = vmatpush1.bf16.msra.mxu0 %v743
        %1096 = vmatprep.subr.bf16.mxu0 0
        %1097 = vmatpush1.bf16.msra.mxu0 0
        %1098 = vmatprep.subr.bf16.mxu0 0
        %1099 = vmatpush1.bf16.msra.mxu0 0
        %1100 = vmatprep.subr.bf16.mxu0 0
        %1101 = vmatpush1.bf16.msra.mxu0 0
        %1102 = vmatprep.subr.bf16.mxu0 0
        %1103 = vmatpush1.bf16.msra.mxu0 0
        %1104 = vmatprep.subr.bf16.mxu0 0
        %1105 = vmatpush1.bf16.msra.mxu0 0
        %1106 = vmatprep.subr.bf16.mxu0 0
        %1107 = vmatpush1.bf16.msra.mxu0 0
        %1108 = vmatprep.subr.bf16.mxu0 0
        %1109 = vmatpush1.bf16.msra.mxu0 0
        %1110 = vmatprep.subr.bf16.mxu0 0
        %1111 = vmatpush1.bf16.msra.mxu0 0
        %1112 = vmatprep.subr.bf16.mxu0 0
        %1113 = vmatpush1.bf16.msra.mxu0 0
        %1114 = vmatprep.subr.bf16.mxu0 0
        %1115 = vmatpush1.bf16.msra.mxu0 0
        %1116 = vmatprep.subr.bf16.mxu0 0
        %1117 = vmatpush1.bf16.msra.mxu0 0
        %1118 = vmatprep.subr.bf16.mxu0 0
        %1119 = vmatpush1.bf16.msra.mxu0 0
        %1120 = vmatprep.subr.bf16.mxu0 0
        %1121 = vmatpush1.bf16.msra.mxu0 0
        %1122 = vmatprep.subr.bf16.mxu0 0
        %1123 = vmatpush1.bf16.msra.mxu0 0
        %1124 = vmatprep.mubr.bf16.mxu0 0
        %1125 = vmatmul.mubr.bf16.gmra.mrb[0].mxu0 %v1090
        %v1126 = vpop.f32.mrb[0].mxu0
        %v1127 = vadd.f32 0.0, %v1126
        %v1128 = vpop.f32.mrb[0].mxu0
        %v1129 = vpop.f32.mrb[0].mxu0
        %v1130 = vadd.f32 0.0, %v1129
        %v1131 = vpop.f32.mrb[0].mxu0
        %1132 = vdwg.mxu0
        %v1134 = vsel %vm422, %v965, 0
        %1136 = vmatprep.subr.bf16.mxu0 0
        %1137 = vmatpush1.bf16.msra.mxu0 %v798
        %1138 = vmatprep.subr.bf16.mxu0 0
        %1139 = vmatpush1.bf16.msra.mxu0 %v799
        %1140 = vmatprep.subr.bf16.mxu0 0
        %1141 = vmatpush1.bf16.msra.mxu0 0
        %1142 = vmatprep.subr.bf16.mxu0 0
        %1143 = vmatpush1.bf16.msra.mxu0 0
        %1144 = vmatprep.subr.bf16.mxu0 0
        %1145 = vmatpush1.bf16.msra.mxu0 0
        %1146 = vmatprep.subr.bf16.mxu0 0
        %1147 = vmatpush1.bf16.msra.mxu0 0
        %1148 = vmatprep.subr.bf16.mxu0 0
        %1149 = vmatpush1.bf16.msra.mxu0 0
        %1150 = vmatprep.subr.bf16.mxu0 0
        %1151 = vmatpush1.bf16.msra.mxu0 0
        %1152 = vmatprep.subr.bf16.mxu0 0
        %1153 = vmatpush1.bf16.msra.mxu0 0
        %1154 = vmatprep.subr.bf16.mxu0 0
        %1155 = vmatpush1.bf16.msra.mxu0 0
        %1156 = vmatprep.subr.bf16.mxu0 0
        %1157 = vmatpush1.bf16.msra.mxu0 0
        %1158 = vmatprep.subr.bf16.mxu0 0
        %1159 = vmatpush1.bf16.msra.mxu0 0
        %1160 = vmatprep.subr.bf16.mxu0 0
        %1161 = vmatpush1.bf16.msra.mxu0 0
        %1162 = vmatprep.subr.bf16.mxu0 0
        %1163 = vmatpush1.bf16.msra.mxu0 0
        %1164 = vmatprep.subr.bf16.mxu0 0
        %1165 = vmatpush1.bf16.msra.mxu0 0
        %1166 = vmatprep.subr.bf16.mxu0 0
        %1167 = vmatpush1.bf16.msra.mxu0 0
        %1168 = vmatprep.mubr.bf16.mxu0 0
        %1169 = vmatmul.mubr.bf16.gmra.mrb[0].mxu0 %v1134
        %v1170 = vpop.f32.mrb[0].mxu0
        %v1171 = vadd.f32 %v1127, %v1170
        %v1172 = vpop.f32.mrb[0].mxu0
        %v1173 = vpop.f32.mrb[0].mxu0
        %v1174 = vadd.f32 %v1130, %v1173
        %v1175 = vpop.f32.mrb[0].mxu0
        %1176 = vdwg.mxu0
        %v1177 = vadd.f32 %v840, %v392
        %v1178 = vadd.f32 %v843, %v393
        %v1179 = vadd.f32 %v1171, %v394
        %v1180 = vadd.f32 %v1174, %v395
        %v1181 = vld [vmem:[%s3] sm:$0x1]
        %v1182 = vld [vmem:[%s4] sm:$0x1]
        %v1183 = vsel %vm422, %v1177, 0.0
        %1184 = vadd.xlane.f32.xlu0 %v1183
        %v1185 = vpop.xlane.xlu0 %1184
        %v1186 = vsel %vm422, %v1178, 0.0
        %1187 = vadd.xlane.f32.xlu0 %v1186
        %v1188 = vpop.xlane.xlu0 %1187
        %v1189 = vsel %vm422, %v1179, 0.0
        %1190 = vadd.xlane.f32.xlu0 %v1189
        %v1191 = vpop.xlane.xlu0 %1190
        %v1192 = vsel %vm422, %v1180, 0.0
        %1193 = vadd.xlane.f32.xlu0 %v1192
        %v1194 = vpop.xlane.xlu0 %1193
        %v1195 = vrcp.pop 32.0
        %v1196 = vmul.f32 %v1185, %v1195
        %v1197 = vmul.f32 %v1188, %v1195
        %v1198 = vmul.f32 %v1191, %v1195
        %v1199 = vmul.f32 %v1194, %v1195
        %v1200 = vsub.f32 %v1177, %v1196
        %v1201 = vsub.f32 %v1178, %v1197
        %v1202 = vsub.f32 %v1179, %v1198
        %v1203 = vsub.f32 %v1180, %v1199
        %v1204 = vmul.f32 %v1200, %v1200
        %v1205 = vmul.f32 %v1201, %v1201
        %v1206 = vmul.f32 %v1202, %v1202
        %v1207 = vmul.f32 %v1203, %v1203
        %v1208 = vsel %vm422, %v1204, 0.0
        %1209 = vadd.xlane.f32.xlu0 %v1208
        %v1210 = vpop.xlane.xlu0 %1209
        %v1211 = vsel %vm422, %v1205, 0.0
        %1212 = vadd.xlane.f32.xlu0 %v1211
        %v1213 = vpop.xlane.xlu0 %1212
        %v1214 = vsel %vm422, %v1206, 0.0
        %1215 = vadd.xlane.f32.xlu0 %v1214
        %v1216 = vpop.xlane.xlu0 %1215
        %v1217 = vsel %vm422, %v1207, 0.0
        %1218 = vadd.xlane.f32.xlu0 %v1217
        %v1219 = vpop.xlane.xlu0 %1218
        %v1220 = vmul.f32 %v1210, %v1195
        %v1221 = vmul.f32 %v1213, %v1195
        %v1222 = vmul.f32 %v1216, %v1195
        %v1223 = vmul.f32 %v1219, %v1195
        %v1224 = vadd.f32 %v1220, 1e-05
        %v1225 = vadd.f32 %v1221, 1e-05
        %v1226 = vadd.f32 %v1222, 1e-05
        %v1227 = vadd.f32 %v1223, 1e-05
        %v1228 = vrsqrt.pop %v1224
        %v1229 = vrsqrt.pop %v1225
        %v1230 = vrsqrt.pop %v1226
        %v1231 = vrsqrt.pop %v1227
        %v1232 = vmul.f32 %v1200, %v1228
        %v1233 = vmul.f32 %v1201, %v1229
        %v1234 = vmul.f32 %v1202, %v1230
        %v1235 = vmul.f32 %v1203, %v1231
        %v1237 = vlaneseq
        %v1238 = vshrl.u32 %v1237, 7
        %v1239 = vsub.s32 0, %v1238
        %v1240 = vrot.slane %v1181, %v1239
        %v1242 = vmul.f32 %v1232, %v1240
        %v1243 = vmul.f32 %v1233, %v1240
        %v1244 = vmul.f32 %v1234, %v1240
        %v1245 = vmul.f32 %v1235, %v1240
        %v1247 = vlaneseq
        %v1248 = vshrl.u32 %v1247, 7
        %v1249 = vsub.s32 0, %v1248
        %v1250 = vrot.slane %v1182, %v1249
        %v1252 = vadd.f32 %v1242, %v1250
        %v1253 = vadd.f32 %v1243, %v1250
        %v1254 = vadd.f32 %v1244, %v1250
        %v1255 = vadd.f32 %v1245, %v1250
        %v1256 = vpack.c.bf16 %v1253, %v1252
        %v1257 = vpack.c.bf16 %v1255, %v1254
        %v1258 = vld [vmem:[%s6] sm:$0x1]
        %v1260 = vshrl.u32 %v1256, 16
        %v1262 = vrot.slane %v1260, 7
        %v1263 = vshll.u32 %v1256, 16
        %v1265 = vor.u32 %v1262, %v1263
        %v1267 = vshrl.u32 %v1257, 16
        %v1269 = vrot.slane %v1267, 7
        %v1270 = vshll.u32 %v1257, 16
        %v1272 = vor.u32 %v1269, %v1270
        %vm1277 = vcmask 1040384
        %vm1278 = vsmask.f32 256
        %vm1279 = vmand %vm1277, %vm1278
        %v1280 = vsel %vm1279, 0, %v1265
        %v1281 = vsel %vm1279, 0, %v1272
        %v1282 = vsel %vm1279, %v1262, 0
        %v1283 = vsel %vm1279, %v1269, 0
        %v1284 = vld [vmem:[%s5] sm:$0xf]
        %v1285 = vld [vmem:[%s5 + $0x4] sm:$0xf]
        %v1286 = vld [vmem:[%s5 + $0x8] sm:$0xf]
        %v1287 = vld [vmem:[%s5 + $0xc] sm:$0xf]
        %vm1288 = vsmask.f32 7424
        %v1290 = vshrl.u32 %v1280, 16
        %v1292 = vshll.u32 %v1280, 16
        %v1294 = vrot.slane %v1292, 1
        %v1295 = vor.u32 %v1290, %v1294
        %v1297 = vshll.u32 %v1282, 16
        %v1299 = vrot.slane %v1297, 1
        %v1300 = vsel %vm1288, %v1295, %v1299
        %v1302 = vshrl.u32 %v1281, 16
        %v1304 = vshll.u32 %v1281, 16
        %v1306 = vrot.slane %v1304, 1
        %v1307 = vor.u32 %v1302, %v1306
        %v1309 = vshll.u32 %v1283, 16
        %v1311 = vrot.slane %v1309, 1
        %v1312 = vsel %vm1288, %v1307, %v1311
        %s1313 = scalar_lea.vmem %s5, 16
        %v1314 = vld [vmem:[%s1313] sm:$0xf]
        %v1315 = vld [vmem:[%s1313 + $0x4] sm:$0xf]
        %v1316 = vld [vmem:[%s1313 + $0x8] sm:$0xf]
        %v1317 = vld [vmem:[%s1313 + $0xc] sm:$0xf]
        %v1322 = vunpack.c.l.b16 %v1314
        %v1323 = vunpack.c.l.b16 %v1315
        %v1324 = vunpack.c.l.b16 %v1316
        %v1325 = vunpack.c.l.b16 %v1317
        %v1326 = vpack.c.b16 %v1323, %v1322
        %v1327 = vpack.c.b16 %v1325, %v1324
        %v1331 = vsel %vm422, %v1300, 0
        %v1334 = vsel %vm422, %v1312, 0
        %1336 = vmatprep.subr.bf16.mxu0 0
        %1337 = vmatpush1.bf16.msra.mxu0 %v1326
        %1338 = vmatprep.subr.bf16.mxu0 0
        %1339 = vmatpush1.bf16.msra.mxu0 %v1327
        %1340 = vmatprep.subr.bf16.mxu0 0
        %1341 = vmatpush1.bf16.msra.mxu0 0
        %1342 = vmatprep.subr.bf16.mxu0 0
        %1343 = vmatpush1.bf16.msra.mxu0 0
        %1344 = vmatprep.subr.bf16.mxu0 0
        %1345 = vmatpush1.bf16.msra.mxu0 0
        %1346 = vmatprep.subr.bf16.mxu0 0
        %1347 = vmatpush1.bf16.msra.mxu0 0
        %1348 = vmatprep.subr.bf16.mxu0 0
        %1349 = vmatpush1.bf16.msra.mxu0 0
        %1350 = vmatprep.subr.bf16.mxu0 0
        %1351 = vmatpush1.bf16.msra.mxu0 0
        %1352 = vmatprep.subr.bf16.mxu0 0
        %1353 = vmatpush1.bf16.msra.mxu0 0
        %1354 = vmatprep.subr.bf16.mxu0 0
        %1355 = vmatpush1.bf16.msra.mxu0 0
        %1356 = vmatprep.subr.bf16.mxu0 0
        %1357 = vmatpush1.bf16.msra.mxu0 0
        %1358 = vmatprep.subr.bf16.mxu0 0
        %1359 = vmatpush1.bf16.msra.mxu0 0
        %1360 = vmatprep.subr.bf16.mxu0 0
        %1361 = vmatpush1.bf16.msra.mxu0 0
        %1362 = vmatprep.subr.bf16.mxu0 0
        %1363 = vmatpush1.bf16.msra.mxu0 0
        %1364 = vmatprep.subr.bf16.mxu0 0
        %1365 = vmatpush1.bf16.msra.mxu0 0
        %1366 = vmatprep.subr.bf16.mxu0 0
        %1367 = vmatpush1.bf16.msra.mxu0 0
        %1368 = vmatprep.mubr.bf16.mxu0 0
        %1369 = vmatmul.mubr.bf16.gmra.mrb[0].mxu0 %v1331
        %v1370 = vpop.f32.mrb[0].mxu0
        %v1371 = vadd.f32 0.0, %v1370
        %v1372 = vpop.f32.mrb[0].mxu0
        %v1373 = vpop.f32.mrb[0].mxu0
        %v1374 = vadd.f32 0.0, %v1373
        %v1375 = vpop.f32.mrb[0].mxu0
        %1376 = vmatprep.mubr.bf16.mxu0 0
        %1377 = vmatmul.mubr.bf16.gmra.mrb[0].mxu0 %v1334
        %v1378 = vpop.f32.mrb[0].mxu0
        %v1379 = vadd.f32 0.0, %v1378
        %v1380 = vpop.f32.mrb[0].mxu0
        %v1381 = vpop.f32.mrb[0].mxu0
        %v1382 = vadd.f32 0.0, %v1381
        %v1383 = vpop.f32.mrb[0].mxu0
        %1384 = vdwg.mxu0
        %v1389 = vunpack.c.l.b16 %v1284
        %v1390 = vunpack.c.l.b16 %v1285
        %v1391 = vunpack.c.l.b16 %v1286
        %v1392 = vunpack.c.l.b16 %v1287
        %v1393 = vpack.c.b16 %v1390, %v1389
        %v1394 = vpack.c.b16 %v1392, %v1391
        %v1397 = vsel %vm422, %v1280, 0
        %v1399 = vsel %vm422, %v1281, 0
        %1401 = vmatprep.subr.bf16.mxu0 0
        %1402 = vmatpush1.bf16.msra.mxu0 %v1393
        %1403 = vmatprep.subr.bf16.mxu0 0
        %1404 = vmatpush1.bf16.msra.mxu0 %v1394
        %1405 = vmatprep.subr.bf16.mxu0 0
        %1406 = vmatpush1.bf16.msra.mxu0 0
        %1407 = vmatprep.subr.bf16.mxu0 0
        %1408 = vmatpush1.bf16.msra.mxu0 0
        %1409 = vmatprep.subr.bf16.mxu0 0
        %1410 = vmatpush1.bf16.msra.mxu0 0
        %1411 = vmatprep.subr.bf16.mxu0 0
        %1412 = vmatpush1.bf16.msra.mxu0 0
        %1413 = vmatprep.subr.bf16.mxu0 0
        %1414 = vmatpush1.bf16.msra.mxu0 0
        %1415 = vmatprep.subr.bf16.mxu0 0
        %1416 = vmatpush1.bf16.msra.mxu0 0
        %1417 = vmatprep.subr.bf16.mxu0 0
        %1418 = vmatpush1.bf16.msra.mxu0 0
        %1419 = vmatprep.subr.bf16.mxu0 0
        %1420 = vmatpush1.bf16.msra.mxu0 0
        %1421 = vmatprep.subr.bf16.mxu0 0
        %1422 = vmatpush1.bf16.msra.mxu0 0
        %1423 = vmatprep.subr.bf16.mxu0 0
        %1424 = vmatpush1.bf16.msra.mxu0 0
        %1425 = vmatprep.subr.bf16.mxu0 0
        %1426 = vmatpush1.bf16.msra.mxu0 0
        %1427 = vmatprep.subr.bf16.mxu0 0
        %1428 = vmatpush1.bf16.msra.mxu0 0
        %1429 = vmatprep.subr.bf16.mxu0 0
        %1430 = vmatpush1.bf16.msra.mxu0 0
        %1431 = vmatprep.subr.bf16.mxu0 0
        %1432 = vmatpush1.bf16.msra.mxu0 0
        %1433 = vmatprep.mubr.bf16.mxu0 0
        %1434 = vmatmul.mubr.bf16.gmra.mrb[0].mxu0 %v1397
        %v1435 = vpop.f32.mrb[0].mxu0
        %v1436 = vadd.f32 %v1371, %v1435
        %v1437 = vpop.f32.mrb[0].mxu0
        %v1438 = vpop.f32.mrb[0].mxu0
        %v1439 = vadd.f32 %v1374, %v1438
        %v1440 = vpop.f32.mrb[0].mxu0
        %1441 = vmatprep.mubr.bf16.mxu0 0
        %1442 = vmatmul.mubr.bf16.gmra.mrb[0].mxu0 %v1399
        %v1443 = vpop.f32.mrb[0].mxu0
        %v1444 = vadd.f32 %v1379, %v1443
        %v1445 = vpop.f32.mrb[0].mxu0
        %v1446 = vpop.f32.mrb[0].mxu0
        %v1447 = vadd.f32 %v1382, %v1446
        %v1448 = vpop.f32.mrb[0].mxu0
        %1449 = vdwg.mxu0
        %vm1454 = vcmask 1046528
        %v1455 = vrot.slane %v1280, 1
        %v1456 = vrot.slane %v1282, 1
        %v1457 = vsel %vm1454, %v1455, %v1456
        %v1458 = vrot.slane %v1281, 1
        %v1459 = vrot.slane %v1283, 1
        %v1460 = vsel %vm1454, %v1458, %v1459
        %s1461 = scalar_lea.vmem %s5, 32
        %v1462 = vld [vmem:[%s1461] sm:$0xf]
        %v1463 = vld [vmem:[%s1461 + $0x4] sm:$0xf]
        %v1464 = vld [vmem:[%s1461 + $0x8] sm:$0xf]
        %v1465 = vld [vmem:[%s1461 + $0xc] sm:$0xf]
        %v1470 = vunpack.c.l.b16 %v1462
        %v1471 = vunpack.c.l.b16 %v1463
        %v1472 = vunpack.c.l.b16 %v1464
        %v1473 = vunpack.c.l.b16 %v1465
        %v1474 = vpack.c.b16 %v1471, %v1470
        %v1475 = vpack.c.b16 %v1473, %v1472
        %v1479 = vsel %vm422, %v1457, 0
        %v1482 = vsel %vm422, %v1460, 0
        %1484 = vmatprep.subr.bf16.mxu0 0
        %1485 = vmatpush1.bf16.msra.mxu0 %v1474
        %1486 = vmatprep.subr.bf16.mxu0 0
        %1487 = vmatpush1.bf16.msra.mxu0 %v1475
        %1488 = vmatprep.subr.bf16.mxu0 0
        %1489 = vmatpush1.bf16.msra.mxu0 0
        %1490 = vmatprep.subr.bf16.mxu0 0
        %1491 = vmatpush1.bf16.msra.mxu0 0
        %1492 = vmatprep.subr.bf16.mxu0 0
        %1493 = vmatpush1.bf16.msra.mxu0 0
        %1494 = vmatprep.subr.bf16.mxu0 0
        %1495 = vmatpush1.bf16.msra.mxu0 0
        %1496 = vmatprep.subr.bf16.mxu0 0
        %1497 = vmatpush1.bf16.msra.mxu0 0
        %1498 = vmatprep.subr.bf16.mxu0 0
        %1499 = vmatpush1.bf16.msra.mxu0 0
        %1500 = vmatprep.subr.bf16.mxu0 0
        %1501 = vmatpush1.bf16.msra.mxu0 0
        %1502 = vmatprep.subr.bf16.mxu0 0
        %1503 = vmatpush1.bf16.msra.mxu0 0
        %1504 = vmatprep.subr.bf16.mxu0 0
        %1505 = vmatpush1.bf16.msra.mxu0 0
        %1506 = vmatprep.subr.bf16.mxu0 0
        %1507 = vmatpush1.bf16.msra.mxu0 0
        %1508 = vmatprep.subr.bf16.mxu0 0
        %1509 = vmatpush1.bf16.msra.mxu0 0
        %1510 = vmatprep.subr.bf16.mxu0 0
        %1511 = vmatpush1.bf16.msra.mxu0 0
        %1512 = vmatprep.subr.bf16.mxu0 0
        %1513 = vmatpush1.bf16.msra.mxu0 0
        %1514 = vmatprep.subr.bf16.mxu0 0
        %1515 = vmatpush1.bf16.msra.mxu0 0
        %1516 = vmatprep.mubr.bf16.mxu0 0
        %1517 = vmatmul.mubr.bf16.gmra.mrb[0].mxu0 %v1479
        %v1518 = vpop.f32.mrb[0].mxu0
        %v1519 = vadd.f32 0.0, %v1518
        %v1520 = vpop.f32.mrb[0].mxu0
        %v1521 = vpop.f32.mrb[0].mxu0
        %v1522 = vadd.f32 0.0, %v1521
        %v1523 = vpop.f32.mrb[0].mxu0
        %1524 = vmatprep.mubr.bf16.mxu0 0
        %1525 = vmatmul.mubr.bf16.gmra.mrb[0].mxu0 %v1482
        %v1526 = vpop.f32.mrb[0].mxu0
        %v1527 = vadd.f32 0.0, %v1526
        %v1528 = vpop.f32.mrb[0].mxu0
        %v1529 = vpop.f32.mrb[0].mxu0
        %v1530 = vadd.f32 0.0, %v1529
        %v1531 = vpop.f32.mrb[0].mxu0
        %1532 = vdwg.mxu0
        %v1533 = vadd.f32 %v1436, %v1519
        %v1534 = vadd.f32 %v1439, %v1522
        %v1535 = vadd.f32 %v1444, %v1527
        %v1536 = vadd.f32 %v1447, %v1530
        %v1538 = vlaneseq
        %v1539 = vshrl.u32 %v1538, 7
        %v1540 = vsub.s32 0, %v1539
        %v1541 = vrot.slane %v1258, %v1540
        %v1543 = vadd.f32 %v1533, %v1541
        %v1544 = vadd.f32 %v1534, %v1541
        %v1545 = vadd.f32 %v1535, %v1541
        %v1546 = vadd.f32 %v1536, %v1541
        %v1547 = vmax.f32 %v1543, 0.0
        %v1548 = vmax.f32 %v1544, 0.0
        %v1549 = vmax.f32 %v1545, 0.0
        %v1550 = vmax.f32 %v1546, 0.0
        %v1551 = vpack.c.bf16 %v1548, %v1547
        %v1552 = vpack.c.bf16 %v1550, %v1549
        %v1553 = vld [vmem:[%s8] sm:$0x1]
        %v1555 = vshrl.u32 %v1551, 16
        %v1557 = vrot.slane %v1555, 7
        %v1558 = vshll.u32 %v1551, 16
        %v1560 = vor.u32 %v1557, %v1558
        %v1562 = vshrl.u32 %v1552, 16
        %v1564 = vrot.slane %v1562, 7
        %v1565 = vshll.u32 %v1552, 16
        %v1567 = vor.u32 %v1564, %v1565
        %v1572 = vsel %vm1279, 0, %v1560
        %v1573 = vsel %vm1279, 0, %v1567
        %v1574 = vsel %vm1279, %v1557, 0
        %v1575 = vsel %vm1279, %v1564, 0
        %v1576 = vld [vmem:[%s7] sm:$0xf]
        %v1577 = vld [vmem:[%s7 + $0x4] sm:$0xf]
        %v1578 = vld [vmem:[%s7 + $0x8] sm:$0xf]
        %v1579 = vld [vmem:[%s7 + $0xc] sm:$0xf]
        %v1580 = vld [vmem:[%s7 + $0x10] sm:$0xf]
        %v1581 = vld [vmem:[%s7 + $0x14] sm:$0xf]
        %v1582 = vld [vmem:[%s7 + $0x18] sm:$0xf]
        %v1583 = vld [vmem:[%s7 + $0x1c] sm:$0xf]
        %v1585 = vshrl.u32 %v1572, 16
        %v1587 = vshll.u32 %v1572, 16
        %v1589 = vrot.slane %v1587, 1
        %v1590 = vor.u32 %v1585, %v1589
        %v1592 = vshll.u32 %v1574, 16
        %v1594 = vrot.slane %v1592, 1
        %v1595 = vsel %vm1288, %v1590, %v1594
        %v1597 = vshrl.u32 %v1573, 16
        %v1599 = vshll.u32 %v1573, 16
        %v1601 = vrot.slane %v1599, 1
        %v1602 = vor.u32 %v1597, %v1601
        %v1604 = vshll.u32 %v1575, 16
        %v1606 = vrot.slane %v1604, 1
        %v1607 = vsel %vm1288, %v1602, %v1606
        %s1608 = scalar_lea.vmem %s7, 32
        %v1609 = vld [vmem:[%s1608] sm:$0xf]
        %v1610 = vld [vmem:[%s1608 + $0x4] sm:$0xf]
        %v1611 = vld [vmem:[%s1608 + $0x8] sm:$0xf]
        %v1612 = vld [vmem:[%s1608 + $0xc] sm:$0xf]
        %v1613 = vld [vmem:[%s1608 + $0x10] sm:$0xf]
        %v1614 = vld [vmem:[%s1608 + $0x14] sm:$0xf]
        %v1615 = vld [vmem:[%s1608 + $0x18] sm:$0xf]
        %v1616 = vld [vmem:[%s1608 + $0x1c] sm:$0xf]
        %v1625 = vunpack.c.l.b16 %v1609
        %v1626 = vunpack.c.l.b16 %v1610
        %v1627 = vunpack.c.l.b16 %v1611
        %v1628 = vunpack.c.l.b16 %v1612
        %v1629 = vunpack.c.l.b16 %v1613
        %v1630 = vunpack.c.l.b16 %v1614
        %v1631 = vunpack.c.l.b16 %v1615
        %v1632 = vunpack.c.l.b16 %v1616
        %v1633 = vpack.c.b16 %v1626, %v1625
        %v1634 = vpack.c.b16 %v1628, %v1627
        %v1635 = vpack.c.b16 %v1630, %v1629
        %v1636 = vpack.c.b16 %v1632, %v1631
        %vm1641 = vcmask 523264
        %v1643 = vsel %vm1641, %v1595, 0
        %v1646 = vsel %vm1641, %v1607, 0
        %1648 = vmatprep.subr.bf16.mxu0 0
        %1649 = vmatpush1.bf16.msra.mxu0 %v1633
        %1650 = vmatprep.subr.bf16.mxu0 0
        %1651 = vmatpush1.bf16.msra.mxu0 %v1634
        %1652 = vmatprep.subr.bf16.mxu0 0
        %1653 = vmatpush1.bf16.msra.mxu0 %v1635
        %1654 = vmatprep.subr.bf16.mxu0 0
        %1655 = vmatpush1.bf16.msra.mxu0 %v1636
        %1656 = vmatprep.subr.bf16.mxu0 0
        %1657 = vmatpush1.bf16.msra.mxu0 0
        %1658 = vmatprep.subr.bf16.mxu0 0
        %1659 = vmatpush1.bf16.msra.mxu0 0
        %1660 = vmatprep.subr.bf16.mxu0 0
        %1661 = vmatpush1.bf16.msra.mxu0 0
        %1662 = vmatprep.subr.bf16.mxu0 0
        %1663 = vmatpush1.bf16.msra.mxu0 0
        %1664 = vmatprep.subr.bf16.mxu0 0
        %1665 = vmatpush1.bf16.msra.mxu0 0
        %1666 = vmatprep.subr.bf16.mxu0 0
        %1667 = vmatpush1.bf16.msra.mxu0 0
        %1668 = vmatprep.subr.bf16.mxu0 0
        %1669 = vmatpush1.bf16.msra.mxu0 0
        %1670 = vmatprep.subr.bf16.mxu0 0
        %1671 = vmatpush1.bf16.msra.mxu0 0
        %1672 = vmatprep.subr.bf16.mxu0 0
        %1673 = vmatpush1.bf16.msra.mxu0 0
        %1674 = vmatprep.subr.bf16.mxu0 0
        %1675 = vmatpush1.bf16.msra.mxu0 0
        %1676 = vmatprep.subr.bf16.mxu0 0
        %1677 = vmatpush1.bf16.msra.mxu0 0
        %1678 = vmatprep.subr.bf16.mxu0 0
        %1679 = vmatpush1.bf16.msra.mxu0 0
        %1680 = vmatprep.mubr.bf16.mxu0 0
        %1681 = vmatmul.mubr.bf16.gmra.mrb[0].mxu0 %v1643
        %v1682 = vpop.f32.mrb[0].mxu0
        %v1683 = vadd.f32 0.0, %v1682
        %v1684 = vpop.f32.mrb[0].mxu0
        %v1685 = vpop.f32.mrb[0].mxu0
        %v1686 = vadd.f32 0.0, %v1685
        %v1687 = vpop.f32.mrb[0].mxu0
        %1688 = vmatprep.mubr.bf16.mxu0 0
        %1689 = vmatmul.mubr.bf16.gmra.mrb[0].mxu0 %v1646
        %v1690 = vpop.f32.mrb[0].mxu0
        %v1691 = vadd.f32 0.0, %v1690
        %v1692 = vpop.f32.mrb[0].mxu0
        %v1693 = vpop.f32.mrb[0].mxu0
        %v1694 = vadd.f32 0.0, %v1693
        %v1695 = vpop.f32.mrb[0].mxu0
        %1696 = vdwg.mxu0
        %v1705 = vunpack.c.l.b16 %v1576
        %v1706 = vunpack.c.l.b16 %v1577
        %v1707 = vunpack.c.l.b16 %v1578
        %v1708 = vunpack.c.l.b16 %v1579
        %v1709 = vunpack.c.l.b16 %v1580
        %v1710 = vunpack.c.l.b16 %v1581
        %v1711 = vunpack.c.l.b16 %v1582
        %v1712 = vunpack.c.l.b16 %v1583
        %v1713 = vpack.c.b16 %v1706, %v1705
        %v1714 = vpack.c.b16 %v1708, %v1707
        %v1715 = vpack.c.b16 %v1710, %v1709
        %v1716 = vpack.c.b16 %v1712, %v1711
        %v1721 = vsel %vm1641, %v1572, 0
        %v1723 = vsel %vm1641, %v1573, 0
        %1725 = vmatprep.subr.bf16.mxu0 0
        %1726 = vmatpush1.bf16.msra.mxu0 %v1713
        %1727 = vmatprep.subr.bf16.mxu0 0
        %1728 = vmatpush1.bf16.msra.mxu0 %v1714
        %1729 = vmatprep.subr.bf16.mxu0 0
        %1730 = vmatpush1.bf16.msra.mxu0 %v1715
        %1731 = vmatprep.subr.bf16.mxu0 0
        %1732 = vmatpush1.bf16.msra.mxu0 %v1716
        %1733 = vmatprep.subr.bf16.mxu0 0
        %1734 = vmatpush1.bf16.msra.mxu0 0
        %1735 = vmatprep.subr.bf16.mxu0 0
        %1736 = vmatpush1.bf16.msra.mxu0 0
        %1737 = vmatprep.subr.bf16.mxu0 0
        %1738 = vmatpush1.bf16.msra.mxu0 0
        %1739 = vmatprep.subr.bf16.mxu0 0
        %1740 = vmatpush1.bf16.msra.mxu0 0
        %1741 = vmatprep.subr.bf16.mxu0 0
        %1742 = vmatpush1.bf16.msra.mxu0 0
        %1743 = vmatprep.subr.bf16.mxu0 0
        %1744 = vmatpush1.bf16.msra.mxu0 0
        %1745 = vmatprep.subr.bf16.mxu0 0
        %1746 = vmatpush1.bf16.msra.mxu0 0
        %1747 = vmatprep.subr.bf16.mxu0 0
        %1748 = vmatpush1.bf16.msra.mxu0 0
        %1749 = vmatprep.subr.bf16.mxu0 0
        %1750 = vmatpush1.bf16.msra.mxu0 0
        %1751 = vmatprep.subr.bf16.mxu0 0
        %1752 = vmatpush1.bf16.msra.mxu0 0
        %1753 = vmatprep.subr.bf16.mxu0 0
        %1754 = vmatpush1.bf16.msra.mxu0 0
        %1755 = vmatprep.subr.bf16.mxu0 0
        %1756 = vmatpush1.bf16.msra.mxu0 0
        %1757 = vmatprep.mubr.bf16.mxu0 0
        %1758 = vmatmul.mubr.bf16.gmra.mrb[0].mxu0 %v1721
        %v1759 = vpop.f32.mrb[0].mxu0
        %v1760 = vadd.f32 %v1683, %v1759
        %v1761 = vpop.f32.mrb[0].mxu0
        %v1762 = vpop.f32.mrb[0].mxu0
        %v1763 = vadd.f32 %v1686, %v1762
        %v1764 = vpop.f32.mrb[0].mxu0
        %1765 = vmatprep.mubr.bf16.mxu0 0
        %1766 = vmatmul.mubr.bf16.gmra.mrb[0].mxu0 %v1723
        %v1767 = vpop.f32.mrb[0].mxu0
        %v1768 = vadd.f32 %v1691, %v1767
        %v1769 = vpop.f32.mrb[0].mxu0
        %v1770 = vpop.f32.mrb[0].mxu0
        %v1771 = vadd.f32 %v1694, %v1770
        %v1772 = vpop.f32.mrb[0].mxu0
        %1773 = vdwg.mxu0
        %v1778 = vrot.slane %v1572, 1
        %v1779 = vrot.slane %v1574, 1
        %v1780 = vsel %vm1454, %v1778, %v1779
        %v1781 = vrot.slane %v1573, 1
        %v1782 = vrot.slane %v1575, 1
        %v1783 = vsel %vm1454, %v1781, %v1782
        %s1784 = scalar_lea.vmem %s7, 64
        %v1785 = vld [vmem:[%s1784] sm:$0xf]
        %v1786 = vld [vmem:[%s1784 + $0x4] sm:$0xf]
        %v1787 = vld [vmem:[%s1784 + $0x8] sm:$0xf]
        %v1788 = vld [vmem:[%s1784 + $0xc] sm:$0xf]
        %v1789 = vld [vmem:[%s1784 + $0x10] sm:$0xf]
        %v1790 = vld [vmem:[%s1784 + $0x14] sm:$0xf]
        %v1791 = vld [vmem:[%s1784 + $0x18] sm:$0xf]
        %v1792 = vld [vmem:[%s1784 + $0x1c] sm:$0xf]
        %v1801 = vunpack.c.l.b16 %v1785
        %v1802 = vunpack.c.l.b16 %v1786
        %v1803 = vunpack.c.l.b16 %v1787
        %v1804 = vunpack.c.l.b16 %v1788
        %v1805 = vunpack.c.l.b16 %v1789
        %v1806 = vunpack.c.l.b16 %v1790
        %v1807 = vunpack.c.l.b16 %v1791
        %v1808 = vunpack.c.l.b16 %v1792
        %v1809 = vpack.c.b16 %v1802, %v1801
        %v1810 = vpack.c.b16 %v1804, %v1803
        %v1811 = vpack.c.b16 %v1806, %v1805
        %v1812 = vpack.c.b16 %v1808, %v1807
        %v1818 = vsel %vm1641, %v1780, 0
        %v1821 = vsel %vm1641, %v1783, 0
        %1823 = vmatprep.subr.bf16.mxu0 0
        %1824 = vmatpush1.bf16.msra.mxu0 %v1809
        %1825 = vmatprep.subr.bf16.mxu0 0
        %1826 = vmatpush1.bf16.msra.mxu0 %v1810
        %1827 = vmatprep.subr.bf16.mxu0 0
        %1828 = vmatpush1.bf16.msra.mxu0 %v1811
        %1829 = vmatprep.subr.bf16.mxu0 0
        %1830 = vmatpush1.bf16.msra.mxu0 %v1812
        %1831 = vmatprep.subr.bf16.mxu0 0
        %1832 = vmatpush1.bf16.msra.mxu0 0
        %1833 = vmatprep.subr.bf16.mxu0 0
        %1834 = vmatpush1.bf16.msra.mxu0 0
        %1835 = vmatprep.subr.bf16.mxu0 0
        %1836 = vmatpush1.bf16.msra.mxu0 0
        %1837 = vmatprep.subr.bf16.mxu0 0
        %1838 = vmatpush1.bf16.msra.mxu0 0
        %1839 = vmatprep.subr.bf16.mxu0 0
        %1840 = vmatpush1.bf16.msra.mxu0 0
        %1841 = vmatprep.subr.bf16.mxu0 0
        %1842 = vmatpush1.bf16.msra.mxu0 0
        %1843 = vmatprep.subr.bf16.mxu0 0
        %1844 = vmatpush1.bf16.msra.mxu0 0
        %1845 = vmatprep.subr.bf16.mxu0 0
        %1846 = vmatpush1.bf16.msra.mxu0 0
        %1847 = vmatprep.subr.bf16.mxu0 0
        %1848 = vmatpush1.bf16.msra.mxu0 0
        %1849 = vmatprep.subr.bf16.mxu0 0
        %1850 = vmatpush1.bf16.msra.mxu0 0
        %1851 = vmatprep.subr.bf16.mxu0 0
        %1852 = vmatpush1.bf16.msra.mxu0 0
        %1853 = vmatprep.subr.bf16.mxu0 0
        %1854 = vmatpush1.bf16.msra.mxu0 0
        %1855 = vmatprep.mubr.bf16.mxu0 0
        %1856 = vmatmul.mubr.bf16.gmra.mrb[0].mxu0 %v1818
        %v1857 = vpop.f32.mrb[0].mxu0
        %v1858 = vadd.f32 0.0, %v1857
        %v1859 = vpop.f32.mrb[0].mxu0
        %v1860 = vpop.f32.mrb[0].mxu0
        %v1861 = vadd.f32 0.0, %v1860
        %v1862 = vpop.f32.mrb[0].mxu0
        %1863 = vmatprep.mubr.bf16.mxu0 0
        %1864 = vmatmul.mubr.bf16.gmra.mrb[0].mxu0 %v1821
        %v1865 = vpop.f32.mrb[0].mxu0
        %v1866 = vadd.f32 0.0, %v1865
        %v1867 = vpop.f32.mrb[0].mxu0
        %v1868 = vpop.f32.mrb[0].mxu0
        %v1869 = vadd.f32 0.0, %v1868
        %v1870 = vpop.f32.mrb[0].mxu0
        %1871 = vdwg.mxu0
        %v1872 = vadd.f32 %v1760, %v1858
        %v1873 = vadd.f32 %v1763, %v1861
        %v1874 = vadd.f32 %v1768, %v1866
        %v1875 = vadd.f32 %v1771, %v1869
        %v1877 = vlaneseq
        %v1878 = vshrl.u32 %v1877, 7
        %v1879 = vsub.s32 0, %v1878
        %v1880 = vrot.slane %v1553, %v1879
        %v1882 = vadd.f32 %v1872, %v1880
        %v1883 = vadd.f32 %v1873, %v1880
        %v1884 = vadd.f32 %v1874, %v1880
        %v1885 = vadd.f32 %v1875, %v1880
        %v1886 = vadd.f32 %v1882, %v1252
        %v1887 = vadd.f32 %v1883, %v1253
        %v1888 = vadd.f32 %v1884, %v1254
        %v1889 = vadd.f32 %v1885, %v1255
        %v1890 = vld [vmem:[%s9] sm:$0x1]
        %v1891 = vld [vmem:[%s10] sm:$0x1]
        %v1892 = vsel %vm422, %v1886, 0.0
        %1893 = vadd.xlane.f32.xlu0 %v1892
        %v1894 = vpop.xlane.xlu0 %1893
        %v1895 = vsel %vm422, %v1887, 0.0
        %1896 = vadd.xlane.f32.xlu0 %v1895
        %v1897 = vpop.xlane.xlu0 %1896
        %v1898 = vsel %vm422, %v1888, 0.0
        %1899 = vadd.xlane.f32.xlu0 %v1898
        %v1900 = vpop.xlane.xlu0 %1899
        %v1901 = vsel %vm422, %v1889, 0.0
        %1902 = vadd.xlane.f32.xlu0 %v1901
        %v1903 = vpop.xlane.xlu0 %1902
        %v1904 = vmul.f32 %v1894, %v1195
        %v1905 = vmul.f32 %v1897, %v1195
        %v1906 = vmul.f32 %v1900, %v1195
        %v1907 = vmul.f32 %v1903, %v1195
        %v1908 = vsub.f32 %v1886, %v1904
        %v1909 = vsub.f32 %v1887, %v1905
        %v1910 = vsub.f32 %v1888, %v1906
        %v1911 = vsub.f32 %v1889, %v1907
        %v1912 = vmul.f32 %v1908, %v1908
        %v1913 = vmul.f32 %v1909, %v1909
        %v1914 = vmul.f32 %v1910, %v1910
        %v1915 = vmul.f32 %v1911, %v1911
        %v1916 = vsel %vm422, %v1912, 0.0
        %1917 = vadd.xlane.f32.xlu0 %v1916
        %v1918 = vpop.xlane.xlu0 %1917
        %v1919 = vsel %vm422, %v1913, 0.0
        %1920 = vadd.xlane.f32.xlu0 %v1919
        %v1921 = vpop.xlane.xlu0 %1920
        %v1922 = vsel %vm422, %v1914, 0.0
        %1923 = vadd.xlane.f32.xlu0 %v1922
        %v1924 = vpop.xlane.xlu0 %1923
        %v1925 = vsel %vm422, %v1915, 0.0
        %1926 = vadd.xlane.f32.xlu0 %v1925
        %v1927 = vpop.xlane.xlu0 %1926
        %v1928 = vmul.f32 %v1918, %v1195
        %v1929 = vmul.f32 %v1921, %v1195
        %v1930 = vmul.f32 %v1924, %v1195
        %v1931 = vmul.f32 %v1927, %v1195
        %v1932 = vadd.f32 %v1928, 1e-05
        %v1933 = vadd.f32 %v1929, 1e-05
        %v1934 = vadd.f32 %v1930, 1e-05
        %v1935 = vadd.f32 %v1931, 1e-05
        %v1936 = vrsqrt.pop %v1932
        %v1937 = vrsqrt.pop %v1933
        %v1938 = vrsqrt.pop %v1934
        %v1939 = vrsqrt.pop %v1935
        %v1940 = vmul.f32 %v1908, %v1936
        %v1941 = vmul.f32 %v1909, %v1937
        %v1942 = vmul.f32 %v1910, %v1938
        %v1943 = vmul.f32 %v1911, %v1939
        %v1945 = vlaneseq
        %v1946 = vshrl.u32 %v1945, 7
        %v1947 = vsub.s32 0, %v1946
        %v1948 = vrot.slane %v1890, %v1947
        %v1950 = vmul.f32 %v1940, %v1948
        %v1951 = vmul.f32 %v1941, %v1948
        %v1952 = vmul.f32 %v1942, %v1948
        %v1953 = vmul.f32 %v1943, %v1948
        %v1955 = vlaneseq
        %v1956 = vshrl.u32 %v1955, 7
        %v1957 = vsub.s32 0, %v1956
        %v1958 = vrot.slane %v1891, %v1957
        %v1960 = vadd.f32 %v1950, %v1958
        %v1961 = vadd.f32 %v1951, %v1958
        %v1962 = vadd.f32 %v1952, %v1958
        %v1963 = vadd.f32 %v1953, %v1958
        %1964 = vst.msk [vmem:[%s382] sm:$0xff] %vm422, %v1960
        %1965 = vst.msk [vmem:[%s382 + $0x8] sm:$0xff] %vm422, %v1961
        %1966 = vst.msk [vmem:[%s382 + $0x10] sm:$0xff] %vm422, %v1962
        %1967 = vst.msk [vmem:[%s382 + $0x18] sm:$0xff] %vm422, %v1963
        %s1968 = sand.u32 %s269, 1
        %s1969 = scalar_lea.sflag [#allocation3], %s1968
        %s1970 = sand.u32 %s269, 1
        %s1971 = smul.addr %s1970, 32
        %s1972 = scalar_lea.vmem [#allocation2], %s1971
        // Predicated region
        $region65: #{tpu_custom_call.1} parent=63 // pred_check
          %p1973 = pneg %p279
        $region66: #{tpu_custom_call.1} parent=63 // pred_check_branch
          %1975 = sbr.rel (%p1973) target = $region68
        $region67: #{tpu_custom_call.1} parent=63 // pred_region
          %s1976 = smul.u32 2, %s25
          %s1978 = ssub.s32 512, 512
          %1979 = vsyncadd %s1969, %s1978
          %s1980 = smul.addr %s1976, 2
          %s1981 = smul.addr %s1980, 128
          %s1982 = scalar_lea.hbm %s11, %s1981
          %s1983 = sshll.u32 %s1972, 4
          %s1984 = int_to_ptr.vmem [resolvable:$true] %s1983
          %1989 = dma.vmem_to_hbm [thread:$0]  %s1984, 512, %s1982, %s1969, 128, 128, 8
        $region68: #{tpu_custom_call.1} parent=63 // pred_fallthru
          _
      $region64: #{tpu_custom_call.1} parent=5 // pred_fallthru
        _
      %p1990 = scmp.le.s32.totalorder 2, %s20
      // Predicated region
      $region69: #{tpu_custom_call.1} parent=5 // pred_check
        %p1991 = pneg %p1990
      $region70: #{tpu_custom_call.1} parent=5 // pred_check_branch
        %1993 = sbr.rel (%p1991) target = $region72
      $region71: #{tpu_custom_call.1} parent=5 // pred_region
        %s1994 = ssub.s32 %s20, 2
        // Predicated region
        $region73: #{tpu_custom_call.1} parent=71 // pred_check
          %p1995 = pneg %p285
        $region74: #{tpu_custom_call.1} parent=71 // pred_check_branch
          %1997 = sbr.rel (%p1995) target = $region76
        $region75: #{tpu_custom_call.1} parent=71 // pred_region
          %s1998 = sand.u32 %s270, 1
          %s1999 = scalar_lea.sflag [#allocation3], %s1998
          %s2000 = sand.u32 %s270, 1
          %s2001 = smul.addr %s2000, 32
          %s2002 = scalar_lea.vmem [#allocation2], %s2001
          %2003 = dma.done %s1999, 512
        $region76: #{tpu_custom_call.1} parent=71 // pred_fallthru
          _
      $region72: #{tpu_custom_call.1} parent=5 // pred_fallthru
        _
    $region6: #{tpu_custom_call.1} parent=1 // loop_footer
      %s24 = sadd.s32 1, %s20
    $region7: #{tpu_custom_call.1} parent=1 // loop_footer_branch
      %19 = sbr.rel target = $region3
    $region8: #{tpu_custom_call.1} parent=1 // loop_exit
      _
    %2004 = vsyncpa [#allocation3], 1
    %s2005 = scalar_lea.sflag [#allocation3], 1
    %2006 = vsyncpa %s2005, 1

</llo_original>
